<compile_context>
chip_gen: v6e
topology: v6e:2x2x1
jax: 0.10.0
libtpu: 0.0.40
codegen_flags: <defaults>
</compile_context>

<pallas_src>
import jax
import jax.numpy as jnp
from jax.experimental import pallas as pl
from jax.experimental.pallas import tpu as pltpu

HIDDEN = 256
LANE = 128


def _prediction_kernel(xm_ref, xr_ref, w1m_ref, w1r_ref, b1_ref,
                       w2_ref, b2_ref, o_ref):
    # Layer 1: h = relu(x @ W1 + b1).  Ragged K handled as aligned + remainder dots.
    xm = xm_ref[...].astype(jnp.bfloat16)
    xr = xr_ref[...].astype(jnp.bfloat16)
    h = jnp.dot(xm, w1m_ref[...], preferred_element_type=jnp.float32)
    h = h + jnp.dot(xr, w1r_ref[...], preferred_element_type=jnp.float32)
    h = jnp.maximum(h + b1_ref[...], 0.0)          # f32 epilogue (no bf16 VPU on v5e)
    # Layer 2 on this grid step's Dout tile.
    y = jnp.dot(h.astype(jnp.bfloat16), w2_ref[...],
                preferred_element_type=jnp.float32)
    o_ref[...] = (y + b2_ref[...]).astype(o_ref.dtype)


def _pick_tile(n, candidates):
    for c in candidates:
        if n % c == 0:
            return c
    return n


def prepare_params(w1, b1, w2, b2):
    """One-time packing: bf16 weights, ragged-K split of W1, 2-D f32 biases.

    w1: (Din, H), b1: (H,), w2: (H, Dout), b2: (Dout,)   (x @ W layout).
    Do this once at parameter-load time so the per-call path never re-slices
    or re-casts the (bandwidth-dominant) weights.
    """
    din, h = w1.shape
    dout = w2.shape[1]
    k_align = (din // LANE) * LANE
    if k_align == din:              # keep the remainder dot non-empty
        k_align -= LANE
    w1 = w1.astype(jnp.bfloat16)
    return dict(
        k_align=k_align,
        w1_main=w1[:k_align],                       # (k_align, H) bf16
        w1_rem=w1[k_align:],                        # (Din - k_align, H) bf16
        b1=b1.astype(jnp.float32).reshape(1, h),
        w2=w2.astype(jnp.bfloat16),                 # (H, Dout) bf16
        b2=b2.astype(jnp.float32).reshape(1, dout),
    )


def prediction_forward(x, params, *, batch_tile=None, dout_tile=None):
    """x: (B, final_dim + action_space) f32.  Returns (B, final_dim) f32."""
    B, din = x.shape
    k_align = params["k_align"]
    k_rem = din - k_align
    h = params["w1_main"].shape[1]
    dout = params["w2"].shape[1]
    assert params["w1_main"].shape == (k_align, h)
    assert params["w1_rem"].shape == (k_rem, h)

    tb = batch_tile or _pick_tile(B, (256, 128, 64, 32, 16, 8))
    td = dout_tile or _pick_tile(dout, (512, 384, 256, 128))
    n_b = B // tb
    n_d = dout // td

    x_main = x[:, :k_align]     # (B, k_align)  - aligned K
    x_rem = x[:, k_align:]      # (B, k_rem)    - tiny remainder (action features)

    return pl.pallas_call(
        _prediction_kernel,
        out_shape=jax.ShapeDtypeStruct((B, dout), jnp.float32),
        # Dout tiles outer, batch tiles inner: every weight block is fetched from
        # HBM exactly once per call and stays resident in VMEM across batch tiles.
        # Both axes are independent -> "parallel" lets v7x's megacore split the
        # Dout tiles (and any batch tiles) across its two TensorCores.
        grid=(n_d, n_b),
        in_specs=[
            pl.BlockSpec((tb, k_align), lambda j, i: (i, 0)),   # x (aligned K)
            pl.BlockSpec((tb, k_rem), lambda j, i: (i, 0)),     # x (remainder K)
            pl.BlockSpec((k_align, h), lambda j, i: (0, 0)),    # W1 main (resident)
            pl.BlockSpec((k_rem, h), lambda j, i: (0, 0)),      # W1 rem  (resident)
            pl.BlockSpec((1, h), lambda j, i: (0, 0)),          # b1      (resident)
            pl.BlockSpec((h, td), lambda j, i: (0, j)),         # W2 tile
            pl.BlockSpec((1, td), lambda j, i: (0, j)),         # b2 tile
        ],
        out_specs=pl.BlockSpec((tb, td), lambda j, i: (i, j)),  # lane-dense (td % 128 == 0)
        compiler_params=pltpu.CompilerParams(
            dimension_semantics=("parallel", "parallel"),
        ),
    )(x_main, x_rem, params["w1_main"], params["w1_rem"], params["b1"],
      params["w2"], params["b2"])


if __name__ == "__main__":
    # Small shapes consistent with the module's forward.
    action_space = 4
    final_dim = 1152
    batch = 2

    key = jax.random.PRNGKey(0)
    k_x, k1, k2, k3, k4 = jax.random.split(key, 5)

    d_in = final_dim + action_space
    bound1 = 1.0 / (d_in ** 0.5)
    bound2 = 1.0 / (HIDDEN ** 0.5)
    # PyTorch nn.Linear-style init, stored in x @ W layout.
    w1 = jax.random.uniform(k1, (d_in, HIDDEN), jnp.float32, -bound1, bound1)
    b1 = jax.random.uniform(k2, (HIDDEN,), jnp.float32, -bound1, bound1)
    w2 = jax.random.uniform(k3, (HIDDEN, final_dim), jnp.float32, -bound2, bound2)
    b2 = jax.random.uniform(k4, (final_dim,), jnp.float32, -bound2, bound2)

    x = jax.random.normal(k_x, (batch, d_in), jnp.float32)

    params = prepare_params(w1, b1, w2, b2)
    out = jax.block_until_ready(prediction_forward(x, params))

    # Pure-JAX reference using the same bf16 weights; tolerance covers the
    # bf16 cast of x / h inside the kernel.
    w1_f = w1.astype(jnp.bfloat16).astype(jnp.float32)
    w2_f = w2.astype(jnp.bfloat16).astype(jnp.float32)
    ref = jnp.maximum(x @ w1_f + b1, 0.0) @ w2_f + b2
    assert out.shape == (batch, final_dim)
    assert jnp.allclose(out, ref, atol=2e-2, rtol=2e-2), \
        float(jnp.max(jnp.abs(out - ref)))

    print("KERNEL_OK")
</pallas_src>

<mosaic_0001>
module attributes {stable_mosaic.version = 11 : i64} {
  func.func @_prediction_kernel(%arg0: i32, %arg1: i32, %arg2: memref<2x1152xf32, #tpu.memory_space<vmem>>, %arg3: memref<2x4xf32, #tpu.memory_space<vmem>>, %arg4: memref<1152x256xbf16, #tpu.memory_space<vmem>>, %arg5: memref<4x256xbf16, #tpu.memory_space<vmem>>, %arg6: memref<1x256xf32, #tpu.memory_space<vmem>>, %arg7: memref<256x384xbf16, #tpu.memory_space<vmem>>, %arg8: memref<1x384xf32, #tpu.memory_space<vmem>>, %arg9: memref<2x384xf32, #tpu.memory_space<vmem>>) attributes {dimension_semantics = [#tpu.dimension_semantics<parallel>, #tpu.dimension_semantics<parallel>], iteration_bounds = array<i64: 3, 1>, scalar_prefetch = 0 : i64, scratch_operands = 0 : i64, tpu.core_type = #tpu.core_type<tc>, window_params = [{transform_indices = @transform_0, window_bounds = array<i64: 2, 1152>}, {transform_indices = @transform_1, window_bounds = array<i64: 2, 4>}, {pipeline_mode = #tpu.pipeline_mode<synchronous>, transform_indices = @transform_2, window_bounds = array<i64: 1152, 256>}, {pipeline_mode = #tpu.pipeline_mode<synchronous>, transform_indices = @transform_3, window_bounds = array<i64: 4, 256>}, {pipeline_mode = #tpu.pipeline_mode<synchronous>, transform_indices = @transform_4, window_bounds = array<i64: 1, 256>}, {transform_indices = @transform_5, window_bounds = array<i64: 256, 384>}, {transform_indices = @transform_6, window_bounds = array<i64: 1, 384>}, {transform_indices = @transform_7, window_bounds = array<i64: 2, 384>}]} {
    %c0 = arith.constant 0 : index
    %c0_0 = arith.constant 0 : index
    %0 = vector.load %arg2[%c0, %c0_0] : memref<2x1152xf32, #tpu.memory_space<vmem>>, vector<2x1152xf32>
    %1 = arith.truncf %0 : vector<2x1152xf32> to vector<2x1152xbf16>
    %c0_1 = arith.constant 0 : index
    %c0_2 = arith.constant 0 : index
    %2 = vector.load %arg3[%c0_1, %c0_2] : memref<2x4xf32, #tpu.memory_space<vmem>>, vector<2x4xf32>
    %3 = arith.truncf %2 : vector<2x4xf32> to vector<2x4xbf16>
    %c0_3 = arith.constant 0 : index
    %c0_4 = arith.constant 0 : index
    %4 = vector.load %arg4[%c0_3, %c0_4] : memref<1152x256xbf16, #tpu.memory_space<vmem>>, vector<1152x256xbf16>
    %cst = arith.constant dense<0.000000e+00> : vector<2x256xf32>
    %5 = tpu.matmul %1, %4, %cst {dimension_numbers = #tpu.dot_dimension_numbers<[1], [0], [0], [1], [0, 0, 1, 1], [], []>} : vector<2x1152xbf16>, vector<1152x256xbf16>, vector<2x256xf32> -> vector<2x256xf32>
    %c0_5 = arith.constant 0 : index
    %c0_6 = arith.constant 0 : index
    %6 = vector.load %arg5[%c0_5, %c0_6] : memref<4x256xbf16, #tpu.memory_space<vmem>>, vector<4x256xbf16>
    %cst_7 = arith.constant dense<0.000000e+00> : vector<2x256xf32>
    %7 = tpu.matmul %3, %6, %cst_7 {dimension_numbers = #tpu.dot_dimension_numbers<[1], [0], [0], [1], [0, 0, 1, 1], [], []>} : vector<2x4xbf16>, vector<4x256xbf16>, vector<2x256xf32> -> vector<2x256xf32>
    %8 = arith.addf %5, %7 : vector<2x256xf32>
    %c0_8 = arith.constant 0 : index
    %c0_9 = arith.constant 0 : index
    %9 = vector.load %arg6[%c0_8, %c0_9] : memref<1x256xf32, #tpu.memory_space<vmem>>, vector<1x256xf32>
    %10 = vector.broadcast %9 : vector<1x256xf32> to vector<2x256xf32>
    %11 = arith.addf %8, %10 : vector<2x256xf32>
    %cst_10 = arith.constant 0.000000e+00 : f32
    %12 = vector.broadcast %cst_10 : f32 to vector<2x256xf32>
    %13 = arith.maximumf %11, %12 : vector<2x256xf32>
    %14 = arith.truncf %13 : vector<2x256xf32> to vector<2x256xbf16>
    %c0_11 = arith.constant 0 : index
    %c0_12 = arith.constant 0 : index
    %15 = vector.load %arg7[%c0_11, %c0_12] : memref<256x384xbf16, #tpu.memory_space<vmem>>, vector<256x384xbf16>
    %cst_13 = arith.constant dense<0.000000e+00> : vector<2x384xf32>
    %16 = tpu.matmul %14, %15, %cst_13 {dimension_numbers = #tpu.dot_dimension_numbers<[1], [0], [0], [1], [0, 0, 1, 1], [], []>} : vector<2x256xbf16>, vector<256x384xbf16>, vector<2x384xf32> -> vector<2x384xf32>
    %c0_14 = arith.constant 0 : index
    %c0_15 = arith.constant 0 : index
    %17 = vector.load %arg8[%c0_14, %c0_15] : memref<1x384xf32, #tpu.memory_space<vmem>>, vector<1x384xf32>
    %18 = vector.broadcast %17 : vector<1x384xf32> to vector<2x384xf32>
    %19 = arith.addf %16, %18 : vector<2x384xf32>
    %c0_16 = arith.constant 0 : index
    %c0_17 = arith.constant 0 : index
    %20 = vector.load %arg9[%c0_16, %c0_17] : memref<2x384xf32, #tpu.memory_space<vmem>>, vector<2x384xf32>
    tpu.vector_store %arg9[%c0_16, %c0_17], %19 {strides = array<i32>} : memref<2x384xf32, #tpu.memory_space<vmem>>, vector<2x384xf32>,
    return
  }
  func.func @transform_0(%arg0: i32, %arg1: i32) -> (i32, i32) {
    %c0_i32 = arith.constant 0 : i32
    %c0_i32_0 = arith.constant 0 : i32
    return %arg1, %c0_i32 : i32, i32
  }
  func.func @transform_1(%arg0: i32, %arg1: i32) -> (i32, i32) {
    %c0_i32 = arith.constant 0 : i32
    %c0_i32_0 = arith.constant 0 : i32
    return %arg1, %c0_i32 : i32, i32
  }
  func.func @transform_2(%arg0: i32, %arg1: i32) -> (i32, i32) {
    %c0_i32 = arith.constant 0 : i32
    %c0_i32_0 = arith.constant 0 : i32
    %c0_i32_1 = arith.constant 0 : i32
    return %c0_i32, %c0_i32_0 : i32, i32
  }
  func.func @transform_3(%arg0: i32, %arg1: i32) -> (i32, i32) {
    %c0_i32 = arith.constant 0 : i32
    %c0_i32_0 = arith.constant 0 : i32
    %c0_i32_1 = arith.constant 0 : i32
    return %c0_i32, %c0_i32_0 : i32, i32
  }
  func.func @transform_4(%arg0: i32, %arg1: i32) -> (i32, i32) {
    %c0_i32 = arith.constant 0 : i32
    %c0_i32_0 = arith.constant 0 : i32
    %c0_i32_1 = arith.constant 0 : i32
    return %c0_i32, %c0_i32_0 : i32, i32
  }
  func.func @transform_5(%arg0: i32, %arg1: i32) -> (i32, i32) {
    %c0_i32 = arith.constant 0 : i32
    %c0_i32_0 = arith.constant 0 : i32
    return %c0_i32, %arg0 : i32, i32
  }
  func.func @transform_6(%arg0: i32, %arg1: i32) -> (i32, i32) {
    %c0_i32 = arith.constant 0 : i32
    %c0_i32_0 = arith.constant 0 : i32
    return %c0_i32, %arg0 : i32, i32
  }
  func.func @transform_7(%arg0: i32, %arg1: i32) -> (i32, i32) {
    %c0_i32 = arith.constant 0 : i32
    return %arg1, %arg0 : i32, i32
  }
}

</mosaic_0001>

<llo_original>
// kernel: tpu_custom_call.1
$region0: #{tpu_custom_call.1}
  #allocation0 [shape = 'u32[]', space=smem, size = 0x4, offset = 0x4, fixed_abs, tag = 'smem constant byte address 0x4 - core index']
  #allocation1 [shape = 'u32[144,128]{1,0:T(1,128)}', space=vmem, size = 0x12000, scoped, tag = 'internal scratch']
  %s0 = inlined_call_operand.hbm [shape: f32[2,1152], index: 0, kind: input, shape index: {}]
  %s1 = inlined_call_operand.hbm [shape: f32[2,4], index: 1, kind: input, shape index: {}]
  %s2 = inlined_call_operand.hbm [shape: bf16[1152,256], index: 2, kind: input, shape index: {}]
  %s3 = inlined_call_operand.hbm [shape: bf16[4,256], index: 3, kind: input, shape index: {}]
  %s4 = inlined_call_operand.hbm [shape: f32[1,256], index: 4, kind: input, shape index: {}]
  %s5 = inlined_call_operand.hbm [shape: bf16[256,1152], index: 5, kind: input, shape index: {}]
  %s6 = inlined_call_operand.vmem [shape: f32[1,1152], index: 6, kind: input, shape index: {}]
  %s7 = inlined_call_operand.hbm [shape: f32[2,1152], index: 7, kind: output, shape index: {}]
  %s8 = sld [smem:[#allocation0]]
  $region85: #{tpu_custom_call.1} parent=0
    _
  %s10 = ssub.s32 1, %s8
  %s11 = scalar_select 0, %s10, %s8
  $region1: #{tpu_custom_call.1} parent=0
    #allocation2 [shape = 'u8[9216]{0}', space=vmem, size = 0x2400, scoped, tag = 'input window, operand 0, single buffered']
    #allocation3 [shape = 's32[2]{0}', space=sflag, size = 0x8, scoped, tag = 'scoped memory for tpu_custom_call.1']
    #allocation4 [shape = 's32[2]{0}', space=sflag, size = 0x8, scoped, tag = 'scoped memory for tpu_custom_call.1']
    #allocation5 [shape = 'u8[1024]{0}', space=vmem, size = 0x400, scoped, tag = 'input window, operand 1, single buffered']
    #allocation6 [shape = 's32[1]{0}', space=sflag, size = 0x4, scoped, tag = 'scoped memory for tpu_custom_call.1']
    #allocation7 [shape = 'u8[589824]{0}', space=vmem, size = 0x90000, scoped, tag = 'input window, operand 2, single buffered']
    #allocation8 [shape = 'u8[2048]{0}', space=vmem, size = 0x800, scoped, tag = 'input window, operand 3, single buffered']
    #allocation9 [shape = 's32[1]{0}', space=sflag, size = 0x4, scoped, tag = 'scoped memory for tpu_custom_call.1']
    #allocation10 [shape = 'u8[1024]{0}', space=vmem, size = 0x400, scoped, tag = 'input window, operand 4, single buffered']
    #allocation11 [shape = 'u8[393216]{0}', space=vmem, size = 0x60000, scoped, tag = 'input window, operand 5']
    #allocation12 [shape = 's32[2]{0}', space=sflag, size = 0x8, scoped, tag = 'scoped memory for tpu_custom_call.1']
    #allocation13 [shape = 'u8[6144]{0}', space=vmem, size = 0x1800, scoped, tag = 'output window, operand 0']
    %12 = vsyncpa [#allocation3], 0
    %13 = vsyncpa [#allocation6], 0
    %14 = vsyncpa [#allocation9], 0
    %15 = vsyncpa [#allocation12], 0
    %s16 = scalar_lea.sflag [#allocation12], 1
    %17 = vsyncpa %s16, 0
    %18 = vsyncpa [#allocation4], 0
    %s19 = scalar_lea.sflag [#allocation4], 1
    %20 = vsyncpa %s19, 0
    loop: start=0, step=1, limit=5
    $region2: #{tpu_custom_call.1} parent=1 // loop_pre_header
      _
    $region3: #{tpu_custom_call.1} parent=1 // loop_header
      %s22 = sphi 0, %s26
      %p23 = scmp.ge.s32.totalorder %s22, 5
      %s29 = sphi 0, %s41
      %s30 = sphi 0, %s37
      %s31 = sphi 0, %s29
      %s32 = sphi 0, %s30
      %s33 = sphi 0, %s31
      %s34 = sphi 0, %s32
      %s44 = sphi 0, %s46
      %s47 = sphi 0, %s44
      %s48 = sphi 0, %s47
      %s64 = sphi 0, %s48
      %s70 = sphi 0, %s72
      %s73 = sphi 0, %s70
      %s74 = sphi 0, %s73
      %s90 = sphi 0, %s74
      %s94 = sphi 0, %s94
      %s96 = sphi 0, %s94
      %s97 = sphi 0, %s96
      %s111 = sphi 0, %s97
      %s115 = sphi 0, %s115
      %s117 = sphi 0, %s115
      %s118 = sphi 0, %s117
      %s132 = sphi 0, %s118
      %s136 = sphi 0, %s136
      %s138 = sphi 0, %s136
      %s139 = sphi 0, %s138
      %s153 = sphi 0, %s139
      %s159 = sphi 0, %s161
      %s162 = sphi 0, %s159
      %s163 = sphi 0, %s162
      %s179 = sphi 0, %s163
      %s185 = sphi 0, %s187
      %s188 = sphi 0, %s185
      %s189 = sphi 0, %s188
      %s205 = sphi 0, %s189
      %s213 = sphi 0, %s215
      %s216 = sphi 0, %s213
      %s217 = sphi 0, %s216
      %s233 = sphi 0, %s217
    $region4: #{tpu_custom_call.1} parent=1 // loop_header_branch
      %25 = sbr.rel (%p23) target = $region8
    $region5: #{tpu_custom_call.1} parent=1 // loop_body
      %s27 = ssub.s32 %s22, 1
      %s28 = ssub.s32 %s22, 2
      %s35 = sadd.s32 1, %s30
      %p36 = scmp.ge.s32.totalorder %s35, 1
      %s37 = scalar_select %p36, 0, %s35
      %s38 = sadd.s32 1, %s29
      %s39 = scalar_select %p36, %s38, %s29
      %p40 = scmp.ge.s32.totalorder %s39, 3
      %s41 = scalar_select %p40, 0, %s39
      %s42 = ssub.s32 %s30, %s37
      %p43 = scmp.eq.s32.totalorder %s42, 0
      %s45 = sadd.s32 %s44, 1
      %s46 = scalar_select %p43, %s44, %s45
      %p49 = pneg %p43
      %p50 = scmp.eq.s32.totalorder %s22, 2
      %p51 = por %p49, %p50
      %p52 = scmp.ne.s32.totalorder %s44, %s47
      %p53 = scmp.eq.s32.totalorder %s22, 0
      %p54 = por %p52, %p53
      %p55 = scmp.ne.s32.totalorder %s44, %s47
      %p56 = scmp.eq.s32.totalorder %s27, 2
      %p57 = por %p55, %p56
      %p58 = scmp.ne.s32.totalorder %s47, %s48
      %p59 = scmp.eq.s32.totalorder %s27, 0
      %p60 = por %p58, %p59
      %p61 = scmp.ne.s32.totalorder %s47, %s48
      %p62 = scmp.eq.s32.totalorder %s28, 2
      %p63 = por %p61, %p62
      %p65 = scmp.ne.s32.totalorder %s48, %s64
      %p66 = scmp.eq.s32.totalorder %s28, 0
      %p67 = por %p65, %p66
      %s68 = ssub.s32 %s30, %s37
      %p69 = scmp.eq.s32.totalorder %s68, 0
      %s71 = sadd.s32 %s70, 1
      %s72 = scalar_select %p69, %s70, %s71
      %p75 = pneg %p69
      %p76 = scmp.eq.s32.totalorder %s22, 2
      %p77 = por %p75, %p76
      %p78 = scmp.ne.s32.totalorder %s70, %s73
      %p79 = scmp.eq.s32.totalorder %s22, 0
      %p80 = por %p78, %p79
      %p81 = scmp.ne.s32.totalorder %s70, %s73
      %p82 = scmp.eq.s32.totalorder %s27, 2
      %p83 = por %p81, %p82
      %p84 = scmp.ne.s32.totalorder %s73, %s74
      %p85 = scmp.eq.s32.totalorder %s27, 0
      %p86 = por %p84, %p85
      %p87 = scmp.ne.s32.totalorder %s73, %s74
      %p88 = scmp.eq.s32.totalorder %s28, 2
      %p89 = por %p87, %p88
      %p91 = scmp.ne.s32.totalorder %s74, %s90
      %p92 = scmp.eq.s32.totalorder %s28, 0
      %p93 = por %p91, %p92
      %s95 = sadd.s32 %s94, 1
      %p98 = scmp.eq.s32.totalorder %s22, 2
      %p99 = scmp.ne.s32.totalorder %s94, %s96
      %p100 = scmp.eq.s32.totalorder %s22, 0
      %p101 = por %p99, %p100
      %p102 = scmp.ne.s32.totalorder %s94, %s96
      %p103 = scmp.eq.s32.totalorder %s27, 2
      %p104 = por %p102, %p103
      %p105 = scmp.ne.s32.totalorder %s96, %s97
      %p106 = scmp.eq.s32.totalorder %s27, 0
      %p107 = por %p105, %p106
      %p108 = scmp.ne.s32.totalorder %s96, %s97
      %p109 = scmp.eq.s32.totalorder %s28, 2
      %p110 = por %p108, %p109
      %p112 = scmp.ne.s32.totalorder %s97, %s111
      %p113 = scmp.eq.s32.totalorder %s28, 0
      %p114 = por %p112, %p113
      %s116 = sadd.s32 %s115, 1
      %p119 = scmp.eq.s32.totalorder %s22, 2
      %p120 = scmp.ne.s32.totalorder %s115, %s117
      %p121 = scmp.eq.s32.totalorder %s22, 0
      %p122 = por %p120, %p121
      %p123 = scmp.ne.s32.totalorder %s115, %s117
      %p124 = scmp.eq.s32.totalorder %s27, 2
      %p125 = por %p123, %p124
      %p126 = scmp.ne.s32.totalorder %s117, %s118
      %p127 = scmp.eq.s32.totalorder %s27, 0
      %p128 = por %p126, %p127
      %p129 = scmp.ne.s32.totalorder %s117, %s118
      %p130 = scmp.eq.s32.totalorder %s28, 2
      %p131 = por %p129, %p130
      %p133 = scmp.ne.s32.totalorder %s118, %s132
      %p134 = scmp.eq.s32.totalorder %s28, 0
      %p135 = por %p133, %p134
      %s137 = sadd.s32 %s136, 1
      %p140 = scmp.eq.s32.totalorder %s22, 2
      %p141 = scmp.ne.s32.totalorder %s136, %s138
      %p142 = scmp.eq.s32.totalorder %s22, 0
      %p143 = por %p141, %p142
      %p144 = scmp.ne.s32.totalorder %s136, %s138
      %p145 = scmp.eq.s32.totalorder %s27, 2
      %p146 = por %p144, %p145
      %p147 = scmp.ne.s32.totalorder %s138, %s139
      %p148 = scmp.eq.s32.totalorder %s27, 0
      %p149 = por %p147, %p148
      %p150 = scmp.ne.s32.totalorder %s138, %s139
      %p151 = scmp.eq.s32.totalorder %s28, 2
      %p152 = por %p150, %p151
      %p154 = scmp.ne.s32.totalorder %s139, %s153
      %p155 = scmp.eq.s32.totalorder %s28, 0
      %p156 = por %p154, %p155
      %s157 = ssub.s32 %s29, %s41
      %p158 = scmp.eq.s32.totalorder %s157, 0
      %s160 = sadd.s32 %s159, 1
      %s161 = scalar_select %p158, %s159, %s160
      %p164 = pneg %p158
      %p165 = scmp.eq.s32.totalorder %s22, 2
      %p166 = por %p164, %p165
      %p167 = scmp.ne.s32.totalorder %s159, %s162
      %p168 = scmp.eq.s32.totalorder %s22, 0
      %p169 = por %p167, %p168
      %p170 = scmp.ne.s32.totalorder %s159, %s162
      %p171 = scmp.eq.s32.totalorder %s27, 2
      %p172 = por %p170, %p171
      %p173 = scmp.ne.s32.totalorder %s162, %s163
      %p174 = scmp.eq.s32.totalorder %s27, 0
      %p175 = por %p173, %p174
      %p176 = scmp.ne.s32.totalorder %s162, %s163
      %p177 = scmp.eq.s32.totalorder %s28, 2
      %p178 = por %p176, %p177
      %p180 = scmp.ne.s32.totalorder %s163, %s179
      %p181 = scmp.eq.s32.totalorder %s28, 0
      %p182 = por %p180, %p181
      %s183 = ssub.s32 %s29, %s41
      %p184 = scmp.eq.s32.totalorder %s183, 0
      %s186 = sadd.s32 %s185, 1
      %s187 = scalar_select %p184, %s185, %s186
      %p190 = pneg %p184
      %p191 = scmp.eq.s32.totalorder %s22, 2
      %p192 = por %p190, %p191
      %p193 = scmp.ne.s32.totalorder %s185, %s188
      %p194 = scmp.eq.s32.totalorder %s22, 0
      %p195 = por %p193, %p194
      %p196 = scmp.ne.s32.totalorder %s185, %s188
      %p197 = scmp.eq.s32.totalorder %s27, 2
      %p198 = por %p196, %p197
      %p199 = scmp.ne.s32.totalorder %s188, %s189
      %p200 = scmp.eq.s32.totalorder %s27, 0
      %p201 = por %p199, %p200
      %p202 = scmp.ne.s32.totalorder %s188, %s189
      %p203 = scmp.eq.s32.totalorder %s28, 2
      %p204 = por %p202, %p203
      %p206 = scmp.ne.s32.totalorder %s189, %s205
      %p207 = scmp.eq.s32.totalorder %s28, 0
      %p208 = por %p206, %p207
      %s209 = ssub.s32 %s30, %s37
      %s210 = ssub.s32 %s29, %s41
      %s211 = sor.u32 %s209, %s210
      %p212 = scmp.eq.s32.totalorder %s211, 0
      %s214 = sadd.s32 %s213, 1
      %s215 = scalar_select %p212, %s213, %s214
      %p218 = pneg %p212
      %p219 = scmp.eq.s32.totalorder %s22, 2
      %p220 = por %p218, %p219
      %p221 = scmp.ne.s32.totalorder %s213, %s216
      %p222 = scmp.eq.s32.totalorder %s22, 0
      %p223 = por %p221, %p222
      %p224 = scmp.ne.s32.totalorder %s213, %s216
      %p225 = scmp.eq.s32.totalorder %s27, 2
      %p226 = por %p224, %p225
      %p227 = scmp.ne.s32.totalorder %s216, %s217
      %p228 = scmp.eq.s32.totalorder %s27, 0
      %p229 = por %p227, %p228
      %p230 = scmp.ne.s32.totalorder %s216, %s217
      %p231 = scmp.eq.s32.totalorder %s28, 2
      %p232 = por %p230, %p231
      %p234 = scmp.ne.s32.totalorder %s217, %s233
      %p235 = scmp.eq.s32.totalorder %s28, 0
      %p236 = por %p234, %p235
      %p237 = scmp.le.s32.totalorder 1, %s22
      %p238 = scmp.lt.s32.totalorder %s22, 4
      %p239 = pnand %p237, %p238
      %p240 = pneg %p239
      // Predicated region
      $region9: #{tpu_custom_call.1} parent=5 // pred_check
        _
      $region10: #{tpu_custom_call.1} parent=5 // pred_check_branch
        %242 = sbr.rel (%p239) target = $region12
      $region11: #{tpu_custom_call.1} parent=5 // pred_region
        %s243 = ssub.s32 %s22, 1
        // Predicated region
        $region13: #{tpu_custom_call.1} parent=11 // pred_check
          %p244 = pneg %p60
        $region14: #{tpu_custom_call.1} parent=11 // pred_check_branch
          %246 = sbr.rel (%p244) target = $region16
        $region15: #{tpu_custom_call.1} parent=11 // pred_region
          %s248 = ssub.s32 288, 288
          %249 = vsyncadd [#allocation3], %s248
          %s250 = smul.addr %s32, 9
          %s251 = smul.addr %s250, 32
          %s252 = scalar_lea.hbm %s0, %s251
          %s254 = sshll.u32 [#allocation2], 4
          %s255 = int_to_ptr.vmem [resolvable:$true] %s254
          %257 = dma.hbm_to_vmem [thread:$0]  %s252, 288, %s255, [#allocation3]
        $region16: #{tpu_custom_call.1} parent=11 // pred_fallthru
          _
        // Predicated region
        $region17: #{tpu_custom_call.1} parent=11 // pred_check
          %p258 = pneg %p86
        $region18: #{tpu_custom_call.1} parent=11 // pred_check_branch
          %260 = sbr.rel (%p258) target = $region20
        $region19: #{tpu_custom_call.1} parent=11 // pred_region
          %s262 = ssub.s32 32, 32
          %263 = vsyncadd [#allocation6], %s262
          %s264 = smul.addr %s32, 32
          %s265 = scalar_lea.hbm %s1, %s264
          %s267 = sshll.u32 [#allocation5], 4
          %s268 = int_to_ptr.vmem [resolvable:$true] %s267
          %270 = dma.hbm_to_vmem [thread:$0]  %s265, 32, %s268, [#allocation6]
        $region20: #{tpu_custom_call.1} parent=11 // pred_fallthru
          _
        // Predicated region
        $region21: #{tpu_custom_call.1} parent=11 // pred_check
          %p271 = pneg %p107
        $region22: #{tpu_custom_call.1} parent=11 // pred_check_branch
          %273 = sbr.rel (%p271) target = $region24
        $region23: #{tpu_custom_call.1} parent=11 // pred_region
          %s275 = ssub.s32 18432, 18432
          %276 = vsyncadd [#allocation6], %s275
          %s277 = sshll.u32 [#allocation7], 4
          %s278 = int_to_ptr.vmem [resolvable:$true] %s277
          %283 = dma.hbm_to_vmem [thread:$0]  %s2, 18432, %s278, [#allocation6], 128, 128, 8
        $region24: #{tpu_custom_call.1} parent=11 // pred_fallthru
          _
        // Predicated region
        $region25: #{tpu_custom_call.1} parent=11 // pred_check
          %p284 = pneg %p128
        $region26: #{tpu_custom_call.1} parent=11 // pred_check_branch
          %286 = sbr.rel (%p284) target = $region28
        $region27: #{tpu_custom_call.1} parent=11 // pred_region
          %s288 = ssub.s32 64, 64
          %289 = vsyncadd [#allocation9], %s288
          %s291 = sshll.u32 [#allocation8], 4
          %s292 = int_to_ptr.vmem [resolvable:$true] %s291
          %294 = dma.hbm_to_vmem [thread:$0]  %s3, 64, %s292, [#allocation9]
        $region28: #{tpu_custom_call.1} parent=11 // pred_fallthru
          _
        // Predicated region
        $region29: #{tpu_custom_call.1} parent=11 // pred_check
          %p295 = pneg %p149
        $region30: #{tpu_custom_call.1} parent=11 // pred_check_branch
          %297 = sbr.rel (%p295) target = $region32
        $region31: #{tpu_custom_call.1} parent=11 // pred_region
          %s299 = ssub.s32 32, 32
          %300 = vsyncadd [#allocation9], %s299
          %s302 = sshll.u32 [#allocation10], 4
          %s303 = int_to_ptr.vmem [resolvable:$true] %s302
          %305 = dma.hbm_to_vmem [thread:$0]  %s4, 32, %s303, [#allocation9]
        $region32: #{tpu_custom_call.1} parent=11 // pred_fallthru
          _
      $region12: #{tpu_custom_call.1} parent=5 // pred_fallthru
        _
      %p306 = scmp.lt.s32.totalorder %s22, 3
      // Predicated region
      $region33: #{tpu_custom_call.1} parent=5 // pred_check
        %p307 = pneg %p306
      $region34: #{tpu_custom_call.1} parent=5 // pred_check_branch
        %309 = sbr.rel (%p307) target = $region36
      $region35: #{tpu_custom_call.1} parent=5 // pred_region
        // Predicated region
        $region37: #{tpu_custom_call.1} parent=35 // pred_check
          %p310 = pneg %p169
        $region38: #{tpu_custom_call.1} parent=35 // pred_check_branch
          %312 = sbr.rel (%p310) target = $region40
        $region39: #{tpu_custom_call.1} parent=35 // pred_region
          %s313 = sand.u32 %s159, 1
          %s314 = scalar_lea.sflag [#allocation12], %s313
          %s315 = sand.u32 %s159, 1
          %s316 = smul.addr %s315, 384
          %s317 = scalar_lea.vmem [#allocation11], %s316
          %s318 = smul.u32 3, %s29
          %s320 = ssub.s32 6144, 6144
          %321 = vsyncadd %s314, %s320
          %s322 = smul.addr %s318, 64
          %s323 = scalar_lea.hbm %s5, %s322
          %s324 = sshll.u32 %s317, 4
          %s325 = int_to_ptr.vmem [resolvable:$true] %s324
          %330 = dma.hbm_to_vmem [thread:$0]  %s323, 6144, %s325, %s314, 576, 192, 12
        $region40: #{tpu_custom_call.1} parent=35 // pred_fallthru
          _
        // Predicated region
        $region41: #{tpu_custom_call.1} parent=35 // pred_check
          %p331 = pneg %p195
        $region42: #{tpu_custom_call.1} parent=35 // pred_check_branch
          %333 = sbr.rel (%p331) target = $region44
        $region43: #{tpu_custom_call.1} parent=35 // pred_region
          %s334 = smul.u32 3, %s29
          %p335 = scmp.lt.s32.totalorder %s334, 8
          %s336 = scalar_select %p335, %s334, 8
          %s337 = scalar_lea.vmem %s6, %s336
          %s338 = smul.u32 3, %s29
        $region44: #{tpu_custom_call.1} parent=35 // pred_fallthru
          _
      $region36: #{tpu_custom_call.1} parent=5 // pred_fallthru
        _
      %p339 = scmp.le.s32.totalorder 1, %s22
      %p340 = scmp.lt.s32.totalorder %s22, 4
      %p341 = pnand %p339, %p340
      %p342 = pneg %p341
      // Predicated region
      $region45: #{tpu_custom_call.1} parent=5 // pred_check
        _
      $region46: #{tpu_custom_call.1} parent=5 // pred_check_branch
        %344 = sbr.rel (%p341) target = $region48
      $region47: #{tpu_custom_call.1} parent=5 // pred_region
        %s345 = ssub.s32 %s22, 1
        // Predicated region
        $region49: #{tpu_custom_call.1} parent=47 // pred_check
          %p346 = pneg %p60
        $region50: #{tpu_custom_call.1} parent=47 // pred_check_branch
          %348 = sbr.rel (%p346) target = $region52
        $region51: #{tpu_custom_call.1} parent=47 // pred_region
          %349 = dma.done [#allocation3], 288
        $region52: #{tpu_custom_call.1} parent=47 // pred_fallthru
          _
        // Predicated region
        $region53: #{tpu_custom_call.1} parent=47 // pred_check
          %p350 = pneg %p86
        $region54: #{tpu_custom_call.1} parent=47 // pred_check_branch
          %352 = sbr.rel (%p350) target = $region56
        $region55: #{tpu_custom_call.1} parent=47 // pred_region
          %353 = dma.done [#allocation6], 32
        $region56: #{tpu_custom_call.1} parent=47 // pred_fallthru
          _
        // Predicated region
        $region57: #{tpu_custom_call.1} parent=47 // pred_check
          %p354 = pneg %p107
        $region58: #{tpu_custom_call.1} parent=47 // pred_check_branch
          %356 = sbr.rel (%p354) target = $region60
        $region59: #{tpu_custom_call.1} parent=47 // pred_region
          %357 = dma.done [#allocation6], 18432
        $region60: #{tpu_custom_call.1} parent=47 // pred_fallthru
          _
        // Predicated region
        $region61: #{tpu_custom_call.1} parent=47 // pred_check
          %p358 = pneg %p128
        $region62: #{tpu_custom_call.1} parent=47 // pred_check_branch
          %360 = sbr.rel (%p358) target = $region64
        $region63: #{tpu_custom_call.1} parent=47 // pred_region
          %361 = dma.done [#allocation9], 64
        $region64: #{tpu_custom_call.1} parent=47 // pred_fallthru
          _
        // Predicated region
        $region65: #{tpu_custom_call.1} parent=47 // pred_check
          %p362 = pneg %p149
        $region66: #{tpu_custom_call.1} parent=47 // pred_check_branch
          %364 = sbr.rel (%p362) target = $region68
        $region67: #{tpu_custom_call.1} parent=47 // pred_region
          %365 = dma.done [#allocation9], 32
        $region68: #{tpu_custom_call.1} parent=47 // pred_fallthru
          _
        %s366 = sand.u32 %s162, 1
        %s367 = scalar_lea.sflag [#allocation12], %s366
        %s368 = sand.u32 %s162, 1
        %s369 = smul.addr %s368, 384
        %s370 = scalar_lea.vmem [#allocation11], %s369
        // Predicated region
        $region69: #{tpu_custom_call.1} parent=47 // pred_check
          %p371 = pneg %p175
        $region70: #{tpu_custom_call.1} parent=47 // pred_check_branch
          %373 = sbr.rel (%p371) target = $region72
        $region71: #{tpu_custom_call.1} parent=47 // pred_region
          %374 = dma.done %s367, 6144
        $region72: #{tpu_custom_call.1} parent=47 // pred_fallthru
          _
        %p375 = pneg %p60
        %p376 = pneg %p57
        %p377 = pneg %p86
        %p378 = pneg %p83
        %p379 = pneg %p107
        %p380 = pneg %p104
        %p381 = pneg %p128
        %p382 = pneg %p125
        %p383 = pneg %p149
        %p384 = pneg %p146
        %s385 = sand.u32 %s162, 1
        %s386 = scalar_lea.sflag [#allocation12], %s385
        %s387 = sand.u32 %s162, 1
        %s388 = smul.addr %s387, 384
        %s389 = scalar_lea.vmem [#allocation11], %s388
        %p390 = pneg %p175
        %p391 = pneg %p172
        %s392 = smul.u32 3, %s31
        %p393 = scmp.lt.s32.totalorder %s392, 8
        %s394 = scalar_select %p393, %s392, 8
        %s395 = scalar_lea.vmem %s6, %s394
        %p396 = pneg %p201
        %p397 = pneg %p198
        %p398 = pneg %p229
        %p399 = pneg %p226
        %s400 = sand.u32 %s216, 1
        %s401 = scalar_lea.sflag [#allocation4], %s400
        %s402 = sand.u32 %s216, 1
        %s403 = smul.addr %s402, 6
        %s404 = scalar_lea.vmem [#allocation13], %s403
        %s405 = smul.u32 3, %s31
        %s406 = smul.u32 3, %s31
        %p407 = scmp.lt.s32.totalorder %s406, 8
        %s408 = scalar_select %p407, %s406, 8
        %s409 = scalar_lea.vmem %s6, %s408
        %s410 = smul.u32 3, %s31
        %s411 = smul.u32 3, %s31
        %v413 = vld [vmem:[#allocation2] sm:$0xff]
        %v414 = vld [vmem:[#allocation2 + $0x8] sm:$0xff]
        %v415 = vld [vmem:[#allocation2 + $0x10] sm:$0x3]
        %v419 = vcombine.high %v413, %v413
        %v421 = vunpack.c.l.s4 1983009808
        %v422 = vunpack.c.0.s8 %v421
        %v423 = vlaneseq
        %v424 = vshrl.u32 %v423, 7
        %v425 = vsub.s32 %v422, %v424
        %v426 = vrot.slane %v413, %v425
        %v428 = vunpack.c.l.s4 1983009808
        %v429 = vunpack.c.0.s8 %v428
        %v430 = vlaneseq
        %v431 = vshrl.u32 %v430, 7
        %v432 = vsub.s32 %v429, %v431
        %v433 = vrot.slane %v419, %v432
        %v434 = vcombine.high %v426, %v426
        %v435 = vcombine.high %v433, %v433
        %v436 = vcombine.high %v414, %v414
        %v438 = vunpack.c.l.s4 1983009808
        %v439 = vunpack.c.0.s8 %v438
        %v440 = vlaneseq
        %v441 = vshrl.u32 %v440, 7
        %v442 = vsub.s32 %v439, %v441
        %v443 = vrot.slane %v414, %v442
        %v445 = vunpack.c.l.s4 1983009808
        %v446 = vunpack.c.0.s8 %v445
        %v447 = vlaneseq
        %v448 = vshrl.u32 %v447, 7
        %v449 = vsub.s32 %v446, %v448
        %v450 = vrot.slane %v436, %v449
        %v451 = vcombine.high %v443, %v443
        %v452 = vcombine.high %v450, %v450
        %v454 = vunpack.c.l.s4 1983009808
        %v455 = vunpack.c.0.s8 %v454
        %v456 = vlaneseq
        %v457 = vshrl.u32 %v456, 7
        %v458 = vsub.s32 %v455, %v457
        %v459 = vrot.slane %v415, %v458
        %v469 = vpack.c.bf16 %v426, %v426
        %v470 = vpack.c.bf16 %v434, %v434
        %v471 = vpack.c.bf16 %v433, %v433
        %v472 = vpack.c.bf16 %v435, %v435
        %v473 = vpack.c.bf16 %v443, %v443
        %v474 = vpack.c.bf16 %v451, %v451
        %v475 = vpack.c.bf16 %v450, %v450
        %v476 = vpack.c.bf16 %v452, %v452
        %v477 = vpack.c.bf16 %v459, %v459
        %v478 = vld [vmem:[#allocation5] sm:$0x3]
        %v479 = vpack.c.bf16 %v478, %v478
        %v480 = vld [vmem:[#allocation7] sm:$0xff]
        %v481 = vld [vmem:[#allocation7 + $0x8] sm:$0xff]
        %v482 = vld [vmem:[#allocation7 + $0x10] sm:$0xff]
        %v483 = vld [vmem:[#allocation7 + $0x18] sm:$0xff]
        %v484 = vld [vmem:[#allocation7 + $0x20] sm:$0xff]
        %v485 = vld [vmem:[#allocation7 + $0x28] sm:$0xff]
        %v486 = vld [vmem:[#allocation7 + $0x30] sm:$0xff]
        %v487 = vld [vmem:[#allocation7 + $0x38] sm:$0xff]
        %v488 = vld [vmem:[#allocation7 + $0x40] sm:$0xff]
        %v489 = vld [vmem:[#allocation7 + $0x48] sm:$0xff]
        %v490 = vld [vmem:[#allocation7 + $0x50] sm:$0xff]
        %v491 = vld [vmem:[#allocation7 + $0x58] sm:$0xff]
        %v492 = vld [vmem:[#allocation7 + $0x60] sm:$0xff]
        %v493 = vld [vmem:[#allocation7 + $0x68] sm:$0xff]
        %v494 = vld [vmem:[#allocation7 + $0x70] sm:$0xff]
        %v495 = vld [vmem:[#allocation7 + $0x78] sm:$0xff]
        %v496 = vld [vmem:[#allocation7 + $0x80] sm:$0xff]
        %v497 = vld [vmem:[#allocation7 + $0x88] sm:$0xff]
        %v498 = vld [vmem:[#allocation7 + $0x90] sm:$0xff]
        %v499 = vld [vmem:[#allocation7 + $0x98] sm:$0xff]
        %v500 = vld [vmem:[#allocation7 + $0xa0] sm:$0xff]
        %v501 = vld [vmem:[#allocation7 + $0xa8] sm:$0xff]
        %v502 = vld [vmem:[#allocation7 + $0xb0] sm:$0xff]
        %v503 = vld [vmem:[#allocation7 + $0xb8] sm:$0xff]
        %v504 = vld [vmem:[#allocation7 + $0xc0] sm:$0xff]
        %v505 = vld [vmem:[#allocation7 + $0xc8] sm:$0xff]
        %v506 = vld [vmem:[#allocation7 + $0xd0] sm:$0xff]
        %v507 = vld [vmem:[#allocation7 + $0xd8] sm:$0xff]
        %v508 = vld [vmem:[#allocation7 + $0xe0] sm:$0xff]
        %v509 = vld [vmem:[#allocation7 + $0xe8] sm:$0xff]
        %v510 = vld [vmem:[#allocation7 + $0xf0] sm:$0xff]
        %v511 = vld [vmem:[#allocation7 + $0xf8] sm:$0xff]
        %v512 = vld [vmem:[#allocation7 + $0x100] sm:$0xff]
        %v513 = vld [vmem:[#allocation7 + $0x108] sm:$0xff]
        %v514 = vld [vmem:[#allocation7 + $0x110] sm:$0xff]
        %v515 = vld [vmem:[#allocation7 + $0x118] sm:$0xff]
        %v516 = vld [vmem:[#allocation7 + $0x120] sm:$0xff]
        %v517 = vld [vmem:[#allocation7 + $0x128] sm:$0xff]
        %v518 = vld [vmem:[#allocation7 + $0x130] sm:$0xff]
        %v519 = vld [vmem:[#allocation7 + $0x138] sm:$0xff]
        %v520 = vld [vmem:[#allocation7 + $0x140] sm:$0xff]
        %v521 = vld [vmem:[#allocation7 + $0x148] sm:$0xff]
        %v522 = vld [vmem:[#allocation7 + $0x150] sm:$0xff]
        %v523 = vld [vmem:[#allocation7 + $0x158] sm:$0xff]
        %v524 = vld [vmem:[#allocation7 + $0x160] sm:$0xff]
        %v525 = vld [vmem:[#allocation7 + $0x168] sm:$0xff]
        %v526 = vld [vmem:[#allocation7 + $0x170] sm:$0xff]
        %v527 = vld [vmem:[#allocation7 + $0x178] sm:$0xff]
        %v528 = vld [vmem:[#allocation7 + $0x180] sm:$0xff]
        %v529 = vld [vmem:[#allocation7 + $0x188] sm:$0xff]
        %v530 = vld [vmem:[#allocation7 + $0x190] sm:$0xff]
        %v531 = vld [vmem:[#allocation7 + $0x198] sm:$0xff]
        %v532 = vld [vmem:[#allocation7 + $0x1a0] sm:$0xff]
        %v533 = vld [vmem:[#allocation7 + $0x1a8] sm:$0xff]
        %v534 = vld [vmem:[#allocation7 + $0x1b0] sm:$0xff]
        %v535 = vld [vmem:[#allocation7 + $0x1b8] sm:$0xff]
        %v536 = vld [vmem:[#allocation7 + $0x1c0] sm:$0xff]
        %v537 = vld [vmem:[#allocation7 + $0x1c8] sm:$0xff]
        %v538 = vld [vmem:[#allocation7 + $0x1d0] sm:$0xff]
        %v539 = vld [vmem:[#allocation7 + $0x1d8] sm:$0xff]
        %v540 = vld [vmem:[#allocation7 + $0x1e0] sm:$0xff]
        %v541 = vld [vmem:[#allocation7 + $0x1e8] sm:$0xff]
        %v542 = vld [vmem:[#allocation7 + $0x1f0] sm:$0xff]
        %v543 = vld [vmem:[#allocation7 + $0x1f8] sm:$0xff]
        %v544 = vld [vmem:[#allocation7 + $0x200] sm:$0xff]
        %v545 = vld [vmem:[#allocation7 + $0x208] sm:$0xff]
        %v546 = vld [vmem:[#allocation7 + $0x210] sm:$0xff]
        %v547 = vld [vmem:[#allocation7 + $0x218] sm:$0xff]
        %v548 = vld [vmem:[#allocation7 + $0x220] sm:$0xff]
        %v549 = vld [vmem:[#allocation7 + $0x228] sm:$0xff]
        %v550 = vld [vmem:[#allocation7 + $0x230] sm:$0xff]
        %v551 = vld [vmem:[#allocation7 + $0x238] sm:$0xff]
        %v552 = vld [vmem:[#allocation7 + $0x240] sm:$0xff]
        %v553 = vld [vmem:[#allocation7 + $0x248] sm:$0xff]
        %v554 = vld [vmem:[#allocation7 + $0x250] sm:$0xff]
        %v555 = vld [vmem:[#allocation7 + $0x258] sm:$0xff]
        %v556 = vld [vmem:[#allocation7 + $0x260] sm:$0xff]
        %v557 = vld [vmem:[#allocation7 + $0x268] sm:$0xff]
        %v558 = vld [vmem:[#allocation7 + $0x270] sm:$0xff]
        %v559 = vld [vmem:[#allocation7 + $0x278] sm:$0xff]
        %v560 = vld [vmem:[#allocation7 + $0x280] sm:$0xff]
        %v561 = vld [vmem:[#allocation7 + $0x288] sm:$0xff]
        %v562 = vld [vmem:[#allocation7 + $0x290] sm:$0xff]
        %v563 = vld [vmem:[#allocation7 + $0x298] sm:$0xff]
        %v564 = vld [vmem:[#allocation7 + $0x2a0] sm:$0xff]
        %v565 = vld [vmem:[#allocation7 + $0x2a8] sm:$0xff]
        %v566 = vld [vmem:[#allocation7 + $0x2b0] sm:$0xff]
        %v567 = vld [vmem:[#allocation7 + $0x2b8] sm:$0xff]
        %v568 = vld [vmem:[#allocation7 + $0x2c0] sm:$0xff]
        %v569 = vld [vmem:[#allocation7 + $0x2c8] sm:$0xff]
        %v570 = vld [vmem:[#allocation7 + $0x2d0] sm:$0xff]
        %v571 = vld [vmem:[#allocation7 + $0x2d8] sm:$0xff]
        %v572 = vld [vmem:[#allocation7 + $0x2e0] sm:$0xff]
        %v573 = vld [vmem:[#allocation7 + $0x2e8] sm:$0xff]
        %v574 = vld [vmem:[#allocation7 + $0x2f0] sm:$0xff]
        %v575 = vld [vmem:[#allocation7 + $0x2f8] sm:$0xff]
        %v576 = vld [vmem:[#allocation7 + $0x300] sm:$0xff]
        %v577 = vld [vmem:[#allocation7 + $0x308] sm:$0xff]
        %v578 = vld [vmem:[#allocation7 + $0x310] sm:$0xff]
        %v579 = vld [vmem:[#allocation7 + $0x318] sm:$0xff]
        %v580 = vld [vmem:[#allocation7 + $0x320] sm:$0xff]
        %v581 = vld [vmem:[#allocation7 + $0x328] sm:$0xff]
        %v582 = vld [vmem:[#allocation7 + $0x330] sm:$0xff]
        %v583 = vld [vmem:[#allocation7 + $0x338] sm:$0xff]
        %v584 = vld [vmem:[#allocation7 + $0x340] sm:$0xff]
        %v585 = vld [vmem:[#allocation7 + $0x348] sm:$0xff]
        %v586 = vld [vmem:[#allocation7 + $0x350] sm:$0xff]
        %v587 = vld [vmem:[#allocation7 + $0x358] sm:$0xff]
        %v588 = vld [vmem:[#allocation7 + $0x360] sm:$0xff]
        %v589 = vld [vmem:[#allocation7 + $0x368] sm:$0xff]
        %v590 = vld [vmem:[#allocation7 + $0x370] sm:$0xff]
        %v591 = vld [vmem:[#allocation7 + $0x378] sm:$0xff]
        %v592 = vld [vmem:[#allocation7 + $0x380] sm:$0xff]
        %v593 = vld [vmem:[#allocation7 + $0x388] sm:$0xff]
        %v594 = vld [vmem:[#allocation7 + $0x390] sm:$0xff]
        %v595 = vld [vmem:[#allocation7 + $0x398] sm:$0xff]
        %v596 = vld [vmem:[#allocation7 + $0x3a0] sm:$0xff]
        %v597 = vld [vmem:[#allocation7 + $0x3a8] sm:$0xff]
        %v598 = vld [vmem:[#allocation7 + $0x3b0] sm:$0xff]
        %v599 = vld [vmem:[#allocation7 + $0x3b8] sm:$0xff]
        %v600 = vld [vmem:[#allocation7 + $0x3c0] sm:$0xff]
        %v601 = vld [vmem:[#allocation7 + $0x3c8] sm:$0xff]
        %v602 = vld [vmem:[#allocation7 + $0x3d0] sm:$0xff]
        %v603 = vld [vmem:[#allocation7 + $0x3d8] sm:$0xff]
        %v604 = vld [vmem:[#allocation7 + $0x3e0] sm:$0xff]
        %v605 = vld [vmem:[#allocation7 + $0x3e8] sm:$0xff]
        %v606 = vld [vmem:[#allocation7 + $0x3f0] sm:$0xff]
        %v607 = vld [vmem:[#allocation7 + $0x3f8] sm:$0xff]
        %v608 = vld [vmem:[#allocation7 + $0x400] sm:$0xff]
        %v609 = vld [vmem:[#allocation7 + $0x408] sm:$0xff]
        %v610 = vld [vmem:[#allocation7 + $0x410] sm:$0xff]
        %v611 = vld [vmem:[#allocation7 + $0x418] sm:$0xff]
        %v612 = vld [vmem:[#allocation7 + $0x420] sm:$0xff]
        %v613 = vld [vmem:[#allocation7 + $0x428] sm:$0xff]
        %v614 = vld [vmem:[#allocation7 + $0x430] sm:$0xff]
        %v615 = vld [vmem:[#allocation7 + $0x438] sm:$0xff]
        %v616 = vld [vmem:[#allocation7 + $0x440] sm:$0xff]
        %v617 = vld [vmem:[#allocation7 + $0x448] sm:$0xff]
        %v618 = vld [vmem:[#allocation7 + $0x450] sm:$0xff]
        %v619 = vld [vmem:[#allocation7 + $0x458] sm:$0xff]
        %v620 = vld [vmem:[#allocation7 + $0x460] sm:$0xff]
        %v621 = vld [vmem:[#allocation7 + $0x468] sm:$0xff]
        %v622 = vld [vmem:[#allocation7 + $0x470] sm:$0xff]
        %v623 = vld [vmem:[#allocation7 + $0x478] sm:$0xff]
        %v624 = vld [vmem:[#allocation8] sm:$0xf]
        %v627 = vunpack.c.l.s4 1983009808
        %v628 = vunpack.c.0.s8 %v627
        %v629 = vlaneseq
        %v630 = vshrl.u32 %v629, 7
        %v631 = vsub.s32 %v628, %v630
        %v632 = vrot.slane %v624, %v631
        %v633 = vcombine.high %v632, %v632
        %vm634 = vcmask 31744
        %v636 = vsel %vm634, %v479, 0
        %vm638 = vcmask 1041408
        %v640 = vsel %vm638, %v632, 0
        %v643 = vsel %vm638, %v633, 0
        %645 = vmatprep.subr.bf16.mxu0 0
        %646 = vmatpush1.bf16.msra.mxu0 0
        %647 = vmatprep.subr.bf16.mxu0 0
        %648 = vmatpush1.bf16.msra.mxu0 0
        %649 = vmatprep.subr.bf16.mxu0 0
        %650 = vmatpush1.bf16.msra.mxu0 0
        %651 = vmatprep.subr.bf16.mxu0 0
        %652 = vmatpush1.bf16.msra.mxu0 0
        %653 = vmatprep.subr.bf16.mxu0 0
        %654 = vmatpush1.bf16.msra.mxu0 0
        %655 = vmatprep.subr.bf16.mxu0 0
        %656 = vmatpush1.bf16.msra.mxu0 0
        %657 = vmatprep.subr.bf16.mxu0 0
        %658 = vmatpush1.bf16.msra.mxu0 0
        %659 = vmatprep.subr.bf16.mxu0 %v643
        %660 = vmatpush1.bf16.msra.mxu0 %v640
        %661 = vmatprep.subr.bf16.mxu0 0
        %662 = vmatpush2.bf16.msra.mxu0 0
        %663 = vmatprep.subr.bf16.mxu0 0
        %664 = vmatpush2.bf16.msra.mxu0 0
        %665 = vmatprep.subr.bf16.mxu0 0
        %666 = vmatpush2.bf16.msra.mxu0 0
        %667 = vmatprep.subr.bf16.mxu0 0
        %668 = vmatpush2.bf16.msra.mxu0 0
        %669 = vmatprep.subr.bf16.mxu0 0
        %670 = vmatpush2.bf16.msra.mxu0 0
        %671 = vmatprep.subr.bf16.mxu0 0
        %672 = vmatpush2.bf16.msra.mxu0 0
        %673 = vmatprep.subr.bf16.mxu0 0
        %674 = vmatpush2.bf16.msra.mxu0 0
        %675 = vmatprep.subr.bf16.mxu0 0
        %676 = vmatpush2.bf16.msra.mxu0 0
        %677 = vmatprep.mubr.bf16.mxu0 0
        %678 = vmatmul.mubr.bf16.gmra.mxu0 %v636
        %v679 = vpop.f32.mrf.mxu0
        %v680 = vadd.f32 0.0, %v679
        %v681 = vpop.f32.mrf.mxu0
        %v682 = vadd.f32 0.0, %v681
        %v683 = vpop.f32.mrf.mxu0
        %v684 = vpop.f32.mrf.mxu0
        %685 = vdwg.mxu0
        %v830 = vunpack.c.l.b16 %v480
        %v831 = vunpack.c.h.b16 %v480
        %v832 = vunpack.c.l.b16 %v481
        %v833 = vunpack.c.h.b16 %v481
        %v834 = vunpack.c.l.b16 %v482
        %v835 = vunpack.c.h.b16 %v482
        %v836 = vunpack.c.l.b16 %v483
        %v837 = vunpack.c.h.b16 %v483
        %v838 = vunpack.c.l.b16 %v484
        %v839 = vunpack.c.h.b16 %v484
        %v840 = vunpack.c.l.b16 %v485
        %v841 = vunpack.c.h.b16 %v485
        %v842 = vunpack.c.l.b16 %v486
        %v843 = vunpack.c.h.b16 %v486
        %v844 = vunpack.c.l.b16 %v487
        %v845 = vunpack.c.h.b16 %v487
        %v846 = vunpack.c.l.b16 %v488
        %v847 = vunpack.c.h.b16 %v488
        %v848 = vunpack.c.l.b16 %v489
        %v849 = vunpack.c.h.b16 %v489
        %v850 = vunpack.c.l.b16 %v490
        %v851 = vunpack.c.h.b16 %v490
        %v852 = vunpack.c.l.b16 %v491
        %v853 = vunpack.c.h.b16 %v491
        %v854 = vunpack.c.l.b16 %v492
        %v855 = vunpack.c.h.b16 %v492
        %v856 = vunpack.c.l.b16 %v493
        %v857 = vunpack.c.h.b16 %v493
        %v858 = vunpack.c.l.b16 %v494
        %v859 = vunpack.c.h.b16 %v494
        %v860 = vunpack.c.l.b16 %v495
        %v861 = vunpack.c.h.b16 %v495
        %v862 = vunpack.c.l.b16 %v496
        %v863 = vunpack.c.h.b16 %v496
        %v864 = vunpack.c.l.b16 %v497
        %v865 = vunpack.c.h.b16 %v497
        %v866 = vunpack.c.l.b16 %v498
        %v867 = vunpack.c.h.b16 %v498
        %v868 = vunpack.c.l.b16 %v499
        %v869 = vunpack.c.h.b16 %v499
        %v870 = vunpack.c.l.b16 %v500
        %v871 = vunpack.c.h.b16 %v500
        %v872 = vunpack.c.l.b16 %v501
        %v873 = vunpack.c.h.b16 %v501
        %v874 = vunpack.c.l.b16 %v502
        %v875 = vunpack.c.h.b16 %v502
        %v876 = vunpack.c.l.b16 %v503
        %v877 = vunpack.c.h.b16 %v503
        %v878 = vunpack.c.l.b16 %v504
        %v879 = vunpack.c.h.b16 %v504
        %v880 = vunpack.c.l.b16 %v505
        %v881 = vunpack.c.h.b16 %v505
        %v882 = vunpack.c.l.b16 %v506
        %v883 = vunpack.c.h.b16 %v506
        %v884 = vunpack.c.l.b16 %v507
        %v885 = vunpack.c.h.b16 %v507
        %v886 = vunpack.c.l.b16 %v508
        %v887 = vunpack.c.h.b16 %v508
        %v888 = vunpack.c.l.b16 %v509
        %v889 = vunpack.c.h.b16 %v509
        %v890 = vunpack.c.l.b16 %v510
        %v891 = vunpack.c.h.b16 %v510
        %v892 = vunpack.c.l.b16 %v511
        %v893 = vunpack.c.h.b16 %v511
        %v894 = vunpack.c.l.b16 %v512
        %v895 = vunpack.c.h.b16 %v512
        %v896 = vunpack.c.l.b16 %v513
        %v897 = vunpack.c.h.b16 %v513
        %v898 = vunpack.c.l.b16 %v514
        %v899 = vunpack.c.h.b16 %v514
        %v900 = vunpack.c.l.b16 %v515
        %v901 = vunpack.c.h.b16 %v515
        %v902 = vunpack.c.l.b16 %v516
        %v903 = vunpack.c.h.b16 %v516
        %v904 = vunpack.c.l.b16 %v517
        %v905 = vunpack.c.h.b16 %v517
        %v906 = vunpack.c.l.b16 %v518
        %v907 = vunpack.c.h.b16 %v518
        %v908 = vunpack.c.l.b16 %v519
        %v909 = vunpack.c.h.b16 %v519
        %v910 = vunpack.c.l.b16 %v520
        %v911 = vunpack.c.h.b16 %v520
        %v912 = vunpack.c.l.b16 %v521
        %v913 = vunpack.c.h.b16 %v521
        %v914 = vunpack.c.l.b16 %v522
        %v915 = vunpack.c.h.b16 %v522
        %v916 = vunpack.c.l.b16 %v523
        %v917 = vunpack.c.h.b16 %v523
        %v918 = vunpack.c.l.b16 %v524
        %v919 = vunpack.c.h.b16 %v524
        %v920 = vunpack.c.l.b16 %v525
        %v921 = vunpack.c.h.b16 %v525
        %v922 = vunpack.c.l.b16 %v526
        %v923 = vunpack.c.h.b16 %v526
        %v924 = vunpack.c.l.b16 %v527
        %v925 = vunpack.c.h.b16 %v527
        %v926 = vunpack.c.l.b16 %v528
        %v927 = vunpack.c.h.b16 %v528
        %v928 = vunpack.c.l.b16 %v529
        %v929 = vunpack.c.h.b16 %v529
        %v930 = vunpack.c.l.b16 %v530
        %v931 = vunpack.c.h.b16 %v530
        %v932 = vunpack.c.l.b16 %v531
        %v933 = vunpack.c.h.b16 %v531
        %v934 = vunpack.c.l.b16 %v532
        %v935 = vunpack.c.h.b16 %v532
        %v936 = vunpack.c.l.b16 %v533
        %v937 = vunpack.c.h.b16 %v533
        %v938 = vunpack.c.l.b16 %v534
        %v939 = vunpack.c.h.b16 %v534
        %v940 = vunpack.c.l.b16 %v535
        %v941 = vunpack.c.h.b16 %v535
        %v942 = vunpack.c.l.b16 %v536
        %v943 = vunpack.c.h.b16 %v536
        %v944 = vunpack.c.l.b16 %v537
        %v945 = vunpack.c.h.b16 %v537
        %v946 = vunpack.c.l.b16 %v538
        %v947 = vunpack.c.h.b16 %v538
        %v948 = vunpack.c.l.b16 %v539
        %v949 = vunpack.c.h.b16 %v539
        %v950 = vunpack.c.l.b16 %v540
        %v951 = vunpack.c.h.b16 %v540
        %v952 = vunpack.c.l.b16 %v541
        %v953 = vunpack.c.h.b16 %v541
        %v954 = vunpack.c.l.b16 %v542
        %v955 = vunpack.c.h.b16 %v542
        %v956 = vunpack.c.l.b16 %v543
        %v957 = vunpack.c.h.b16 %v543
        %v958 = vunpack.c.l.b16 %v544
        %v959 = vunpack.c.h.b16 %v544
        %v960 = vunpack.c.l.b16 %v545
        %v961 = vunpack.c.h.b16 %v545
        %v962 = vunpack.c.l.b16 %v546
        %v963 = vunpack.c.h.b16 %v546
        %v964 = vunpack.c.l.b16 %v547
        %v965 = vunpack.c.h.b16 %v547
        %v966 = vunpack.c.l.b16 %v548
        %v967 = vunpack.c.h.b16 %v548
        %v968 = vunpack.c.l.b16 %v549
        %v969 = vunpack.c.h.b16 %v549
        %v970 = vunpack.c.l.b16 %v550
        %v971 = vunpack.c.h.b16 %v550
        %v972 = vunpack.c.l.b16 %v551
        %v973 = vunpack.c.h.b16 %v551
        %v974 = vunpack.c.l.b16 %v552
        %v975 = vunpack.c.h.b16 %v552
        %v976 = vunpack.c.l.b16 %v553
        %v977 = vunpack.c.h.b16 %v553
        %v978 = vunpack.c.l.b16 %v554
        %v979 = vunpack.c.h.b16 %v554
        %v980 = vunpack.c.l.b16 %v555
        %v981 = vunpack.c.h.b16 %v555
        %v982 = vunpack.c.l.b16 %v556
        %v983 = vunpack.c.h.b16 %v556
        %v984 = vunpack.c.l.b16 %v557
        %v985 = vunpack.c.h.b16 %v557
        %v986 = vunpack.c.l.b16 %v558
        %v987 = vunpack.c.h.b16 %v558
        %v988 = vunpack.c.l.b16 %v559
        %v989 = vunpack.c.h.b16 %v559
        %v990 = vunpack.c.l.b16 %v560
        %v991 = vunpack.c.h.b16 %v560
        %v992 = vunpack.c.l.b16 %v561
        %v993 = vunpack.c.h.b16 %v561
        %v994 = vunpack.c.l.b16 %v562
        %v995 = vunpack.c.h.b16 %v562
        %v996 = vunpack.c.l.b16 %v563
        %v997 = vunpack.c.h.b16 %v563
        %v998 = vunpack.c.l.b16 %v564
        %v999 = vunpack.c.h.b16 %v564
        %v1000 = vunpack.c.l.b16 %v565
        %v1001 = vunpack.c.h.b16 %v565
        %v1002 = vunpack.c.l.b16 %v566
        %v1003 = vunpack.c.h.b16 %v566
        %v1004 = vunpack.c.l.b16 %v567
        %v1005 = vunpack.c.h.b16 %v567
        %v1006 = vunpack.c.l.b16 %v568
        %v1007 = vunpack.c.h.b16 %v568
        %v1008 = vunpack.c.l.b16 %v569
        %v1009 = vunpack.c.h.b16 %v569
        %v1010 = vunpack.c.l.b16 %v570
        %v1011 = vunpack.c.h.b16 %v570
        %v1012 = vunpack.c.l.b16 %v571
        %v1013 = vunpack.c.h.b16 %v571
        %v1014 = vunpack.c.l.b16 %v572
        %v1015 = vunpack.c.h.b16 %v572
        %v1016 = vunpack.c.l.b16 %v573
        %v1017 = vunpack.c.h.b16 %v573
        %v1018 = vunpack.c.l.b16 %v574
        %v1019 = vunpack.c.h.b16 %v574
        %v1020 = vunpack.c.l.b16 %v575
        %v1021 = vunpack.c.h.b16 %v575
        %v1022 = vunpack.c.l.b16 %v576
        %v1023 = vunpack.c.h.b16 %v576
        %v1024 = vunpack.c.l.b16 %v577
        %v1025 = vunpack.c.h.b16 %v577
        %v1026 = vunpack.c.l.b16 %v578
        %v1027 = vunpack.c.h.b16 %v578
        %v1028 = vunpack.c.l.b16 %v579
        %v1029 = vunpack.c.h.b16 %v579
        %v1030 = vunpack.c.l.b16 %v580
        %v1031 = vunpack.c.h.b16 %v580
        %v1032 = vunpack.c.l.b16 %v581
        %v1033 = vunpack.c.h.b16 %v581
        %v1034 = vunpack.c.l.b16 %v582
        %v1035 = vunpack.c.h.b16 %v582
        %v1036 = vunpack.c.l.b16 %v583
        %v1037 = vunpack.c.h.b16 %v583
        %v1038 = vunpack.c.l.b16 %v584
        %v1039 = vunpack.c.h.b16 %v584
        %v1040 = vunpack.c.l.b16 %v585
        %v1041 = vunpack.c.h.b16 %v585
        %v1042 = vunpack.c.l.b16 %v586
        %v1043 = vunpack.c.h.b16 %v586
        %v1044 = vunpack.c.l.b16 %v587
        %v1045 = vunpack.c.h.b16 %v587
        %v1046 = vunpack.c.l.b16 %v588
        %v1047 = vunpack.c.h.b16 %v588
        %v1048 = vunpack.c.l.b16 %v589
        %v1049 = vunpack.c.h.b16 %v589
        %v1050 = vunpack.c.l.b16 %v590
        %v1051 = vunpack.c.h.b16 %v590
        %v1052 = vunpack.c.l.b16 %v591
        %v1053 = vunpack.c.h.b16 %v591
        %v1054 = vunpack.c.l.b16 %v592
        %v1055 = vunpack.c.h.b16 %v592
        %v1056 = vunpack.c.l.b16 %v593
        %v1057 = vunpack.c.h.b16 %v593
        %v1058 = vunpack.c.l.b16 %v594
        %v1059 = vunpack.c.h.b16 %v594
        %v1060 = vunpack.c.l.b16 %v595
        %v1061 = vunpack.c.h.b16 %v595
        %v1062 = vunpack.c.l.b16 %v596
        %v1063 = vunpack.c.h.b16 %v596
        %v1064 = vunpack.c.l.b16 %v597
        %v1065 = vunpack.c.h.b16 %v597
        %v1066 = vunpack.c.l.b16 %v598
        %v1067 = vunpack.c.h.b16 %v598
        %v1068 = vunpack.c.l.b16 %v599
        %v1069 = vunpack.c.h.b16 %v599
        %v1070 = vunpack.c.l.b16 %v600
        %v1071 = vunpack.c.h.b16 %v600
        %v1072 = vunpack.c.l.b16 %v601
        %v1073 = vunpack.c.h.b16 %v601
        %v1074 = vunpack.c.l.b16 %v602
        %v1075 = vunpack.c.h.b16 %v602
        %v1076 = vunpack.c.l.b16 %v603
        %v1077 = vunpack.c.h.b16 %v603
        %v1078 = vunpack.c.l.b16 %v604
        %v1079 = vunpack.c.h.b16 %v604
        %v1080 = vunpack.c.l.b16 %v605
        %v1081 = vunpack.c.h.b16 %v605
        %v1082 = vunpack.c.l.b16 %v606
        %v1083 = vunpack.c.h.b16 %v606
        %v1084 = vunpack.c.l.b16 %v607
        %v1085 = vunpack.c.h.b16 %v607
        %v1086 = vunpack.c.l.b16 %v608
        %v1087 = vunpack.c.h.b16 %v608
        %v1088 = vunpack.c.l.b16 %v609
        %v1089 = vunpack.c.h.b16 %v609
        %v1090 = vunpack.c.l.b16 %v610
        %v1091 = vunpack.c.h.b16 %v610
        %v1092 = vunpack.c.l.b16 %v611
        %v1093 = vunpack.c.h.b16 %v611
        %v1094 = vunpack.c.l.b16 %v612
        %v1095 = vunpack.c.h.b16 %v612
        %v1096 = vunpack.c.l.b16 %v613
        %v1097 = vunpack.c.h.b16 %v613
        %v1098 = vunpack.c.l.b16 %v614
        %v1099 = vunpack.c.h.b16 %v614
        %v1100 = vunpack.c.l.b16 %v615
        %v1101 = vunpack.c.h.b16 %v615
        %v1102 = vunpack.c.l.b16 %v616
        %v1103 = vunpack.c.h.b16 %v616
        %v1104 = vunpack.c.l.b16 %v617
        %v1105 = vunpack.c.h.b16 %v617
        %v1106 = vunpack.c.l.b16 %v618
        %v1107 = vunpack.c.h.b16 %v618
        %v1108 = vunpack.c.l.b16 %v619
        %v1109 = vunpack.c.h.b16 %v619
        %v1110 = vunpack.c.l.b16 %v620
        %v1111 = vunpack.c.h.b16 %v620
        %v1112 = vunpack.c.l.b16 %v621
        %v1113 = vunpack.c.h.b16 %v621
        %v1114 = vunpack.c.l.b16 %v622
        %v1115 = vunpack.c.h.b16 %v622
        %v1116 = vunpack.c.l.b16 %v623
        %v1117 = vunpack.c.h.b16 %v623
        %v1118 = vpack.c.b16 %v832, %v830
        %v1119 = vpack.c.b16 %v833, %v831
        %v1120 = vpack.c.b16 %v836, %v834
        %v1121 = vpack.c.b16 %v837, %v835
        %v1122 = vpack.c.b16 %v840, %v838
        %v1123 = vpack.c.b16 %v841, %v839
        %v1124 = vpack.c.b16 %v844, %v842
        %v1125 = vpack.c.b16 %v845, %v843
        %v1126 = vpack.c.b16 %v848, %v846
        %v1127 = vpack.c.b16 %v849, %v847
        %v1128 = vpack.c.b16 %v852, %v850
        %v1129 = vpack.c.b16 %v853, %v851
        %v1130 = vpack.c.b16 %v856, %v854
        %v1131 = vpack.c.b16 %v857, %v855
        %v1132 = vpack.c.b16 %v860, %v858
        %v1133 = vpack.c.b16 %v861, %v859
        %v1134 = vpack.c.b16 %v864, %v862
        %v1135 = vpack.c.b16 %v865, %v863
        %v1136 = vpack.c.b16 %v868, %v866
        %v1137 = vpack.c.b16 %v869, %v867
        %v1138 = vpack.c.b16 %v872, %v870
        %v1139 = vpack.c.b16 %v873, %v871
        %v1140 = vpack.c.b16 %v876, %v874
        %v1141 = vpack.c.b16 %v877, %v875
        %v1142 = vpack.c.b16 %v880, %v878
        %v1143 = vpack.c.b16 %v881, %v879
        %v1144 = vpack.c.b16 %v884, %v882
        %v1145 = vpack.c.b16 %v885, %v883
        %v1146 = vpack.c.b16 %v888, %v886
        %v1147 = vpack.c.b16 %v889, %v887
        %v1148 = vpack.c.b16 %v892, %v890
        %v1149 = vpack.c.b16 %v893, %v891
        %v1150 = vpack.c.b16 %v896, %v894
        %v1151 = vpack.c.b16 %v897, %v895
        %v1152 = vpack.c.b16 %v900, %v898
        %v1153 = vpack.c.b16 %v901, %v899
        %v1154 = vpack.c.b16 %v904, %v902
        %v1155 = vpack.c.b16 %v905, %v903
        %v1156 = vpack.c.b16 %v908, %v906
        %v1157 = vpack.c.b16 %v909, %v907
        %v1158 = vpack.c.b16 %v912, %v910
        %v1159 = vpack.c.b16 %v913, %v911
        %v1160 = vpack.c.b16 %v916, %v914
        %v1161 = vpack.c.b16 %v917, %v915
        %v1162 = vpack.c.b16 %v920, %v918
        %v1163 = vpack.c.b16 %v921, %v919
        %v1164 = vpack.c.b16 %v924, %v922
        %v1165 = vpack.c.b16 %v925, %v923
        %v1166 = vpack.c.b16 %v928, %v926
        %v1167 = vpack.c.b16 %v929, %v927
        %v1168 = vpack.c.b16 %v932, %v930
        %v1169 = vpack.c.b16 %v933, %v931
        %v1170 = vpack.c.b16 %v936, %v934
        %v1171 = vpack.c.b16 %v937, %v935
        %v1172 = vpack.c.b16 %v940, %v938
        %v1173 = vpack.c.b16 %v941, %v939
        %v1174 = vpack.c.b16 %v944, %v942
        %v1175 = vpack.c.b16 %v945, %v943
        %v1176 = vpack.c.b16 %v948, %v946
        %v1177 = vpack.c.b16 %v949, %v947
        %v1178 = vpack.c.b16 %v952, %v950
        %v1179 = vpack.c.b16 %v953, %v951
        %v1180 = vpack.c.b16 %v956, %v954
        %v1181 = vpack.c.b16 %v957, %v955
        %v1182 = vpack.c.b16 %v960, %v958
        %v1183 = vpack.c.b16 %v961, %v959
        %v1184 = vpack.c.b16 %v964, %v962
        %v1185 = vpack.c.b16 %v965, %v963
        %v1186 = vpack.c.b16 %v968, %v966
        %v1187 = vpack.c.b16 %v969, %v967
        %v1188 = vpack.c.b16 %v972, %v970
        %v1189 = vpack.c.b16 %v973, %v971
        %v1190 = vpack.c.b16 %v976, %v974
        %v1191 = vpack.c.b16 %v977, %v975
        %v1192 = vpack.c.b16 %v980, %v978
        %v1193 = vpack.c.b16 %v981, %v979
        %v1194 = vpack.c.b16 %v984, %v982
        %v1195 = vpack.c.b16 %v985, %v983
        %v1196 = vpack.c.b16 %v988, %v986
        %v1197 = vpack.c.b16 %v989, %v987
        %v1198 = vpack.c.b16 %v992, %v990
        %v1199 = vpack.c.b16 %v993, %v991
        %v1200 = vpack.c.b16 %v996, %v994
        %v1201 = vpack.c.b16 %v997, %v995
        %v1202 = vpack.c.b16 %v1000, %v998
        %v1203 = vpack.c.b16 %v1001, %v999
        %v1204 = vpack.c.b16 %v1004, %v1002
        %v1205 = vpack.c.b16 %v1005, %v1003
        %v1206 = vpack.c.b16 %v1008, %v1006
        %v1207 = vpack.c.b16 %v1009, %v1007
        %v1208 = vpack.c.b16 %v1012, %v1010
        %v1209 = vpack.c.b16 %v1013, %v1011
        %v1210 = vpack.c.b16 %v1016, %v1014
        %v1211 = vpack.c.b16 %v1017, %v1015
        %v1212 = vpack.c.b16 %v1020, %v1018
        %v1213 = vpack.c.b16 %v1021, %v1019
        %v1214 = vpack.c.b16 %v1024, %v1022
        %v1215 = vpack.c.b16 %v1025, %v1023
        %v1216 = vpack.c.b16 %v1028, %v1026
        %v1217 = vpack.c.b16 %v1029, %v1027
        %v1218 = vpack.c.b16 %v1032, %v1030
        %v1219 = vpack.c.b16 %v1033, %v1031
        %v1220 = vpack.c.b16 %v1036, %v1034
        %v1221 = vpack.c.b16 %v1037, %v1035
        %v1222 = vpack.c.b16 %v1040, %v1038
        %v1223 = vpack.c.b16 %v1041, %v1039
        %v1224 = vpack.c.b16 %v1044, %v1042
        %v1225 = vpack.c.b16 %v1045, %v1043
        %v1226 = vpack.c.b16 %v1048, %v1046
        %v1227 = vpack.c.b16 %v1049, %v1047
        %v1228 = vpack.c.b16 %v1052, %v1050
        %v1229 = vpack.c.b16 %v1053, %v1051
        %v1230 = vpack.c.b16 %v1056, %v1054
        %v1231 = vpack.c.b16 %v1057, %v1055
        %v1232 = vpack.c.b16 %v1060, %v1058
        %v1233 = vpack.c.b16 %v1061, %v1059
        %v1234 = vpack.c.b16 %v1064, %v1062
        %v1235 = vpack.c.b16 %v1065, %v1063
        %v1236 = vpack.c.b16 %v1068, %v1066
        %v1237 = vpack.c.b16 %v1069, %v1067
        %v1238 = vpack.c.b16 %v1072, %v1070
        %v1239 = vpack.c.b16 %v1073, %v1071
        %v1240 = vpack.c.b16 %v1076, %v1074
        %v1241 = vpack.c.b16 %v1077, %v1075
        %v1242 = vpack.c.b16 %v1080, %v1078
        %v1243 = vpack.c.b16 %v1081, %v1079
        %v1244 = vpack.c.b16 %v1084, %v1082
        %v1245 = vpack.c.b16 %v1085, %v1083
        %v1246 = vpack.c.b16 %v1088, %v1086
        %v1247 = vpack.c.b16 %v1089, %v1087
        %v1248 = vpack.c.b16 %v1092, %v1090
        %v1249 = vpack.c.b16 %v1093, %v1091
        %v1250 = vpack.c.b16 %v1096, %v1094
        %v1251 = vpack.c.b16 %v1097, %v1095
        %v1252 = vpack.c.b16 %v1100, %v1098
        %v1253 = vpack.c.b16 %v1101, %v1099
        %v1254 = vpack.c.b16 %v1104, %v1102
        %v1255 = vpack.c.b16 %v1105, %v1103
        %v1256 = vpack.c.b16 %v1108, %v1106
        %v1257 = vpack.c.b16 %v1109, %v1107
        %v1258 = vpack.c.b16 %v1112, %v1110
        %v1259 = vpack.c.b16 %v1113, %v1111
        %v1260 = vpack.c.b16 %v1116, %v1114
        %v1261 = vpack.c.b16 %v1117, %v1115
        %1406 = vmatprep.subr.bf16.mxu0 %v1133
        %1407 = vmatpush1.bf16.msra.mxu0 %v1132
        %1408 = vmatprep.subr.bf16.mxu0 %v1131
        %1409 = vmatpush1.bf16.msra.mxu0 %v1130
        %1410 = vmatprep.subr.bf16.mxu0 %v1129
        %1411 = vmatpush1.bf16.msra.mxu0 %v1128
        %1412 = vmatprep.subr.bf16.mxu0 %v1127
        %1413 = vmatpush1.bf16.msra.mxu0 %v1126
        %1414 = vmatprep.subr.bf16.mxu0 %v1125
        %1415 = vmatpush1.bf16.msra.mxu0 %v1124
        %1416 = vmatprep.subr.bf16.mxu0 %v1123
        %1417 = vmatpush1.bf16.msra.mxu0 %v1122
        %1418 = vmatprep.subr.bf16.mxu0 %v1121
        %1419 = vmatpush1.bf16.msra.mxu0 %v1120
        %1420 = vmatprep.subr.bf16.mxu0 %v1119
        %1421 = vmatpush1.bf16.msra.mxu0 %v1118
        %1422 = vmatprep.subr.bf16.mxu0 %v1149
        %1423 = vmatpush2.bf16.msra.mxu0 %v1148
        %1424 = vmatprep.subr.bf16.mxu0 %v1147
        %1425 = vmatpush2.bf16.msra.mxu0 %v1146
        %1426 = vmatprep.subr.bf16.mxu0 %v1145
        %1427 = vmatpush2.bf16.msra.mxu0 %v1144
        %1428 = vmatprep.subr.bf16.mxu0 %v1143
        %1429 = vmatpush2.bf16.msra.mxu0 %v1142
        %1430 = vmatprep.subr.bf16.mxu0 %v1141
        %1431 = vmatpush2.bf16.msra.mxu0 %v1140
        %1432 = vmatprep.subr.bf16.mxu0 %v1139
        %1433 = vmatpush2.bf16.msra.mxu0 %v1138
        %1434 = vmatprep.subr.bf16.mxu0 %v1137
        %1435 = vmatpush2.bf16.msra.mxu0 %v1136
        %1436 = vmatprep.subr.bf16.mxu0 %v1135
        %1437 = vmatpush2.bf16.msra.mxu0 %v1134
        %1438 = vmatprep.mubr.bf16.mxu0 %v470
        %1439 = vmatmul.mubr.bf16.gmra.mxu0 %v469
        %v1440 = vpop.f32.mrf.mxu0
        %v1441 = vadd.f32 %v680, %v1440
        %v1442 = vpop.f32.mrf.mxu0
        %v1443 = vadd.f32 %v682, %v1442
        %v1444 = vpop.f32.mrf.mxu0
        %v1445 = vpop.f32.mrf.mxu0
        %1446 = vdwg.mxu0
        %1447 = vmatprep.subr.bf16.mxu0 %v1165
        %1448 = vmatpush1.bf16.msra.mxu0 %v1164
        %1449 = vmatprep.subr.bf16.mxu0 %v1163
        %1450 = vmatpush1.bf16.msra.mxu0 %v1162
        %1451 = vmatprep.subr.bf16.mxu0 %v1161
        %1452 = vmatpush1.bf16.msra.mxu0 %v1160
        %1453 = vmatprep.subr.bf16.mxu0 %v1159
        %1454 = vmatpush1.bf16.msra.mxu0 %v1158
        %1455 = vmatprep.subr.bf16.mxu0 %v1157
        %1456 = vmatpush1.bf16.msra.mxu0 %v1156
        %1457 = vmatprep.subr.bf16.mxu0 %v1155
        %1458 = vmatpush1.bf16.msra.mxu0 %v1154
        %1459 = vmatprep.subr.bf16.mxu0 %v1153
        %1460 = vmatpush1.bf16.msra.mxu0 %v1152
        %1461 = vmatprep.subr.bf16.mxu0 %v1151
        %1462 = vmatpush1.bf16.msra.mxu0 %v1150
        %1463 = vmatprep.subr.bf16.mxu0 %v1181
        %1464 = vmatpush2.bf16.msra.mxu0 %v1180
        %1465 = vmatprep.subr.bf16.mxu0 %v1179
        %1466 = vmatpush2.bf16.msra.mxu0 %v1178
        %1467 = vmatprep.subr.bf16.mxu0 %v1177
        %1468 = vmatpush2.bf16.msra.mxu0 %v1176
        %1469 = vmatprep.subr.bf16.mxu0 %v1175
        %1470 = vmatpush2.bf16.msra.mxu0 %v1174
        %1471 = vmatprep.subr.bf16.mxu0 %v1173
        %1472 = vmatpush2.bf16.msra.mxu0 %v1172
        %1473 = vmatprep.subr.bf16.mxu0 %v1171
        %1474 = vmatpush2.bf16.msra.mxu0 %v1170
        %1475 = vmatprep.subr.bf16.mxu0 %v1169
        %1476 = vmatpush2.bf16.msra.mxu0 %v1168
        %1477 = vmatprep.subr.bf16.mxu0 %v1167
        %1478 = vmatpush2.bf16.msra.mxu0 %v1166
        %1479 = vmatprep.mubr.bf16.mxu0 %v472
        %1480 = vmatmul.mubr.bf16.gmra.mxu0 %v471
        %v1481 = vpop.f32.mrf.mxu0
        %v1482 = vadd.f32 %v1441, %v1481
        %v1483 = vpop.f32.mrf.mxu0
        %v1484 = vadd.f32 %v1443, %v1483
        %v1485 = vpop.f32.mrf.mxu0
        %v1486 = vpop.f32.mrf.mxu0
        %1487 = vdwg.mxu0
        %1488 = vmatprep.subr.bf16.mxu0 %v1197
        %1489 = vmatpush1.bf16.msra.mxu0 %v1196
        %1490 = vmatprep.subr.bf16.mxu0 %v1195
        %1491 = vmatpush1.bf16.msra.mxu0 %v1194
        %1492 = vmatprep.subr.bf16.mxu0 %v1193
        %1493 = vmatpush1.bf16.msra.mxu0 %v1192
        %1494 = vmatprep.subr.bf16.mxu0 %v1191
        %1495 = vmatpush1.bf16.msra.mxu0 %v1190
        %1496 = vmatprep.subr.bf16.mxu0 %v1189
        %1497 = vmatpush1.bf16.msra.mxu0 %v1188
        %1498 = vmatprep.subr.bf16.mxu0 %v1187
        %1499 = vmatpush1.bf16.msra.mxu0 %v1186
        %1500 = vmatprep.subr.bf16.mxu0 %v1185
        %1501 = vmatpush1.bf16.msra.mxu0 %v1184
        %1502 = vmatprep.subr.bf16.mxu0 %v1183
        %1503 = vmatpush1.bf16.msra.mxu0 %v1182
        %1504 = vmatprep.subr.bf16.mxu0 %v1213
        %1505 = vmatpush2.bf16.msra.mxu0 %v1212
        %1506 = vmatprep.subr.bf16.mxu0 %v1211
        %1507 = vmatpush2.bf16.msra.mxu0 %v1210
        %1508 = vmatprep.subr.bf16.mxu0 %v1209
        %1509 = vmatpush2.bf16.msra.mxu0 %v1208
        %1510 = vmatprep.subr.bf16.mxu0 %v1207
        %1511 = vmatpush2.bf16.msra.mxu0 %v1206
        %1512 = vmatprep.subr.bf16.mxu0 %v1205
        %1513 = vmatpush2.bf16.msra.mxu0 %v1204
        %1514 = vmatprep.subr.bf16.mxu0 %v1203
        %1515 = vmatpush2.bf16.msra.mxu0 %v1202
        %1516 = vmatprep.subr.bf16.mxu0 %v1201
        %1517 = vmatpush2.bf16.msra.mxu0 %v1200
        %1518 = vmatprep.subr.bf16.mxu0 %v1199
        %1519 = vmatpush2.bf16.msra.mxu0 %v1198
        %1520 = vmatprep.mubr.bf16.mxu0 %v474
        %1521 = vmatmul.mubr.bf16.gmra.mxu0 %v473
        %v1522 = vpop.f32.mrf.mxu0
        %v1523 = vadd.f32 %v1482, %v1522
        %v1524 = vpop.f32.mrf.mxu0
        %v1525 = vadd.f32 %v1484, %v1524
        %v1526 = vpop.f32.mrf.mxu0
        %v1527 = vpop.f32.mrf.mxu0
        %1528 = vdwg.mxu0
        %1529 = vmatprep.subr.bf16.mxu0 %v1229
        %1530 = vmatpush1.bf16.msra.mxu0 %v1228
        %1531 = vmatprep.subr.bf16.mxu0 %v1227
        %1532 = vmatpush1.bf16.msra.mxu0 %v1226
        %1533 = vmatprep.subr.bf16.mxu0 %v1225
        %1534 = vmatpush1.bf16.msra.mxu0 %v1224
        %1535 = vmatprep.subr.bf16.mxu0 %v1223
        %1536 = vmatpush1.bf16.msra.mxu0 %v1222
        %1537 = vmatprep.subr.bf16.mxu0 %v1221
        %1538 = vmatpush1.bf16.msra.mxu0 %v1220
        %1539 = vmatprep.subr.bf16.mxu0 %v1219
        %1540 = vmatpush1.bf16.msra.mxu0 %v1218
        %1541 = vmatprep.subr.bf16.mxu0 %v1217
        %1542 = vmatpush1.bf16.msra.mxu0 %v1216
        %1543 = vmatprep.subr.bf16.mxu0 %v1215
        %1544 = vmatpush1.bf16.msra.mxu0 %v1214
        %1545 = vmatprep.subr.bf16.mxu0 %v1245
        %1546 = vmatpush2.bf16.msra.mxu0 %v1244
        %1547 = vmatprep.subr.bf16.mxu0 %v1243
        %1548 = vmatpush2.bf16.msra.mxu0 %v1242
        %1549 = vmatprep.subr.bf16.mxu0 %v1241
        %1550 = vmatpush2.bf16.msra.mxu0 %v1240
        %1551 = vmatprep.subr.bf16.mxu0 %v1239
        %1552 = vmatpush2.bf16.msra.mxu0 %v1238
        %1553 = vmatprep.subr.bf16.mxu0 %v1237
        %1554 = vmatpush2.bf16.msra.mxu0 %v1236
        %1555 = vmatprep.subr.bf16.mxu0 %v1235
        %1556 = vmatpush2.bf16.msra.mxu0 %v1234
        %1557 = vmatprep.subr.bf16.mxu0 %v1233
        %1558 = vmatpush2.bf16.msra.mxu0 %v1232
        %1559 = vmatprep.subr.bf16.mxu0 %v1231
        %1560 = vmatpush2.bf16.msra.mxu0 %v1230
        %1561 = vmatprep.mubr.bf16.mxu0 %v476
        %1562 = vmatmul.mubr.bf16.gmra.mxu0 %v475
        %v1563 = vpop.f32.mrf.mxu0
        %v1564 = vadd.f32 %v1523, %v1563
        %v1565 = vpop.f32.mrf.mxu0
        %v1566 = vadd.f32 %v1525, %v1565
        %v1567 = vpop.f32.mrf.mxu0
        %v1568 = vpop.f32.mrf.mxu0
        %1569 = vdwg.mxu0
        %1570 = vmatprep.subr.bf16.mxu0 %v1261
        %1571 = vmatpush1.bf16.msra.mxu0 %v1260
        %1572 = vmatprep.subr.bf16.mxu0 %v1259
        %1573 = vmatpush1.bf16.msra.mxu0 %v1258
        %1574 = vmatprep.subr.bf16.mxu0 %v1257
        %1575 = vmatpush1.bf16.msra.mxu0 %v1256
        %1576 = vmatprep.subr.bf16.mxu0 %v1255
        %1577 = vmatpush1.bf16.msra.mxu0 %v1254
        %1578 = vmatprep.subr.bf16.mxu0 %v1253
        %1579 = vmatpush1.bf16.msra.mxu0 %v1252
        %1580 = vmatprep.subr.bf16.mxu0 %v1251
        %1581 = vmatpush1.bf16.msra.mxu0 %v1250
        %1582 = vmatprep.subr.bf16.mxu0 %v1249
        %1583 = vmatpush1.bf16.msra.mxu0 %v1248
        %1584 = vmatprep.subr.bf16.mxu0 %v1247
        %1585 = vmatpush1.bf16.msra.mxu0 %v1246
        %1586 = vmatprep.subr.bf16.mxu0 0
        %1587 = vmatpush2.bf16.msra.mxu0 0
        %1588 = vmatprep.subr.bf16.mxu0 0
        %1589 = vmatpush2.bf16.msra.mxu0 0
        %1590 = vmatprep.subr.bf16.mxu0 0
        %1591 = vmatpush2.bf16.msra.mxu0 0
        %1592 = vmatprep.subr.bf16.mxu0 0
        %1593 = vmatpush2.bf16.msra.mxu0 0
        %1594 = vmatprep.subr.bf16.mxu0 0
        %1595 = vmatpush2.bf16.msra.mxu0 0
        %1596 = vmatprep.subr.bf16.mxu0 0
        %1597 = vmatpush2.bf16.msra.mxu0 0
        %1598 = vmatprep.subr.bf16.mxu0 0
        %1599 = vmatpush2.bf16.msra.mxu0 0
        %1600 = vmatprep.subr.bf16.mxu0 0
        %1601 = vmatpush2.bf16.msra.mxu0 0
        %1602 = vmatprep.mubr.bf16.mxu0 0
        %1603 = vmatmul.mubr.bf16.gmra.mxu0 %v477
        %v1604 = vpop.f32.mrf.mxu0
        %v1605 = vadd.f32 %v1564, %v1604
        %v1606 = vpop.f32.mrf.mxu0
        %v1607 = vadd.f32 %v1566, %v1606
        %v1608 = vpop.f32.mrf.mxu0
        %v1609 = vpop.f32.mrf.mxu0
        %1610 = vdwg.mxu0
        %v1611 = vld [vmem:[#allocation10] sm:$0x3]
        %v1613 = vlaneseq
        %v1614 = vshrl.u32 %v1613, 7
        %v1615 = vsub.s32 0, %v1614
        %v1616 = vrot.slane %v1611, %v1615
        %v1617 = vlaneseq
        %v1618 = vshrl.u32 %v1617, 7
        %v1619 = vsub.s32 1, %v1618
        %v1620 = vrot.slane %v1611, %v1619
        %v1623 = vadd.f32 %v1605, %v1616
        %v1624 = vadd.f32 %v1607, %v1620
        %v1625 = vmax.f32 %v1623, 0.0
        %v1626 = vmax.f32 %v1624, 0.0
        %v1627 = vpack.c.bf16 %v1625, %v1625
        %v1628 = vpack.c.bf16 %v1626, %v1626
        %v1629 = vld [vmem:[%s370] sm:$0xff]
        %v1630 = vld [vmem:[%s370 + $0x8] sm:$0xf]
        %v1631 = vld [vmem:[%s370 + $0xc] sm:$0xff]
        %v1632 = vld [vmem:[%s370 + $0x14] sm:$0xf]
        %v1633 = vld [vmem:[%s370 + $0x18] sm:$0xff]
        %v1634 = vld [vmem:[%s370 + $0x20] sm:$0xf]
        %v1635 = vld [vmem:[%s370 + $0x24] sm:$0xff]
        %v1636 = vld [vmem:[%s370 + $0x2c] sm:$0xf]
        %v1637 = vld [vmem:[%s370 + $0x30] sm:$0xff]
        %v1638 = vld [vmem:[%s370 + $0x38] sm:$0xf]
        %v1639 = vld [vmem:[%s370 + $0x3c] sm:$0xff]
        %v1640 = vld [vmem:[%s370 + $0x44] sm:$0xf]
        %v1641 = vld [vmem:[%s370 + $0x48] sm:$0xff]
        %v1642 = vld [vmem:[%s370 + $0x50] sm:$0xf]
        %v1643 = vld [vmem:[%s370 + $0x54] sm:$0xff]
        %v1644 = vld [vmem:[%s370 + $0x5c] sm:$0xf]
        %v1645 = vld [vmem:[%s370 + $0x60] sm:$0xff]
        %v1646 = vld [vmem:[%s370 + $0x68] sm:$0xf]
        %v1647 = vld [vmem:[%s370 + $0x6c] sm:$0xff]
        %v1648 = vld [vmem:[%s370 + $0x74] sm:$0xf]
        %v1649 = vld [vmem:[%s370 + $0x78] sm:$0xff]
        %v1650 = vld [vmem:[%s370 + $0x80] sm:$0xf]
        %v1651 = vld [vmem:[%s370 + $0x84] sm:$0xff]
        %v1652 = vld [vmem:[%s370 + $0x8c] sm:$0xf]
        %v1653 = vld [vmem:[%s370 + $0x90] sm:$0xff]
        %v1654 = vld [vmem:[%s370 + $0x98] sm:$0xf]
        %v1655 = vld [vmem:[%s370 + $0x9c] sm:$0xff]
        %v1656 = vld [vmem:[%s370 + $0xa4] sm:$0xf]
        %v1657 = vld [vmem:[%s370 + $0xa8] sm:$0xff]
        %v1658 = vld [vmem:[%s370 + $0xb0] sm:$0xf]
        %v1659 = vld [vmem:[%s370 + $0xb4] sm:$0xff]
        %v1660 = vld [vmem:[%s370 + $0xbc] sm:$0xf]
        %v1661 = vld [vmem:[%s370 + $0xc0] sm:$0xff]
        %v1662 = vld [vmem:[%s370 + $0xc8] sm:$0xf]
        %v1663 = vld [vmem:[%s370 + $0xcc] sm:$0xff]
        %v1664 = vld [vmem:[%s370 + $0xd4] sm:$0xf]
        %v1665 = vld [vmem:[%s370 + $0xd8] sm:$0xff]
        %v1666 = vld [vmem:[%s370 + $0xe0] sm:$0xf]
        %v1667 = vld [vmem:[%s370 + $0xe4] sm:$0xff]
        %v1668 = vld [vmem:[%s370 + $0xec] sm:$0xf]
        %v1669 = vld [vmem:[%s370 + $0xf0] sm:$0xff]
        %v1670 = vld [vmem:[%s370 + $0xf8] sm:$0xf]
        %v1671 = vld [vmem:[%s370 + $0xfc] sm:$0xff]
        %v1672 = vld [vmem:[%s370 + $0x104] sm:$0xf]
        %v1673 = vld [vmem:[%s370 + $0x108] sm:$0xff]
        %v1674 = vld [vmem:[%s370 + $0x110] sm:$0xf]
        %v1675 = vld [vmem:[%s370 + $0x114] sm:$0xff]
        %v1676 = vld [vmem:[%s370 + $0x11c] sm:$0xf]
        %v1677 = vld [vmem:[%s370 + $0x120] sm:$0xff]
        %v1678 = vld [vmem:[%s370 + $0x128] sm:$0xf]
        %v1679 = vld [vmem:[%s370 + $0x12c] sm:$0xff]
        %v1680 = vld [vmem:[%s370 + $0x134] sm:$0xf]
        %v1681 = vld [vmem:[%s370 + $0x138] sm:$0xff]
        %v1682 = vld [vmem:[%s370 + $0x140] sm:$0xf]
        %v1683 = vld [vmem:[%s370 + $0x144] sm:$0xff]
        %v1684 = vld [vmem:[%s370 + $0x14c] sm:$0xf]
        %v1685 = vld [vmem:[%s370 + $0x150] sm:$0xff]
        %v1686 = vld [vmem:[%s370 + $0x158] sm:$0xf]
        %v1687 = vld [vmem:[%s370 + $0x15c] sm:$0xff]
        %v1688 = vld [vmem:[%s370 + $0x164] sm:$0xf]
        %v1689 = vld [vmem:[%s370 + $0x168] sm:$0xff]
        %v1690 = vld [vmem:[%s370 + $0x170] sm:$0xf]
        %v1691 = vld [vmem:[%s370 + $0x174] sm:$0xff]
        %v1692 = vld [vmem:[%s370 + $0x17c] sm:$0xf]
        %v1693 = vld [vmem:[%s409] sm:$0x7]
        %v1695 = vlaneseq
        %v1696 = vshrl.u32 %v1695, 7
        %v1697 = vsub.s32 0, %v1696
        %v1698 = vrot.slane %v1693, %v1697
        %v1699 = vlaneseq
        %v1700 = vshrl.u32 %v1699, 7
        %v1701 = vsub.s32 1, %v1700
        %v1702 = vrot.slane %v1693, %v1701
        %v1703 = vlaneseq
        %v1704 = vshrl.u32 %v1703, 7
        %v1705 = vsub.s32 2, %v1704
        %v1706 = vrot.slane %v1693, %v1705
        %v1774 = vunpack.c.l.b16 %v1629
        %v1775 = vunpack.c.h.b16 %v1629
        %v1776 = vunpack.c.l.b16 %v1630
        %v1777 = vunpack.c.l.b16 %v1631
        %v1778 = vunpack.c.h.b16 %v1631
        %v1779 = vunpack.c.l.b16 %v1632
        %v1780 = vunpack.c.l.b16 %v1633
        %v1781 = vunpack.c.h.b16 %v1633
        %v1782 = vunpack.c.l.b16 %v1634
        %v1783 = vunpack.c.l.b16 %v1635
        %v1784 = vunpack.c.h.b16 %v1635
        %v1785 = vunpack.c.l.b16 %v1636
        %v1786 = vunpack.c.l.b16 %v1637
        %v1787 = vunpack.c.h.b16 %v1637
        %v1788 = vunpack.c.l.b16 %v1638
        %v1789 = vunpack.c.l.b16 %v1639
        %v1790 = vunpack.c.h.b16 %v1639
        %v1791 = vunpack.c.l.b16 %v1640
        %v1792 = vunpack.c.l.b16 %v1641
        %v1793 = vunpack.c.h.b16 %v1641
        %v1794 = vunpack.c.l.b16 %v1642
        %v1795 = vunpack.c.l.b16 %v1643
        %v1796 = vunpack.c.h.b16 %v1643
        %v1797 = vunpack.c.l.b16 %v1644
        %v1798 = vunpack.c.l.b16 %v1645
        %v1799 = vunpack.c.h.b16 %v1645
        %v1800 = vunpack.c.l.b16 %v1646
        %v1801 = vunpack.c.l.b16 %v1647
        %v1802 = vunpack.c.h.b16 %v1647
        %v1803 = vunpack.c.l.b16 %v1648
        %v1804 = vunpack.c.l.b16 %v1649
        %v1805 = vunpack.c.h.b16 %v1649
        %v1806 = vunpack.c.l.b16 %v1650
        %v1807 = vunpack.c.l.b16 %v1651
        %v1808 = vunpack.c.h.b16 %v1651
        %v1809 = vunpack.c.l.b16 %v1652
        %v1810 = vunpack.c.l.b16 %v1653
        %v1811 = vunpack.c.h.b16 %v1653
        %v1812 = vunpack.c.l.b16 %v1654
        %v1813 = vunpack.c.l.b16 %v1655
        %v1814 = vunpack.c.h.b16 %v1655
        %v1815 = vunpack.c.l.b16 %v1656
        %v1816 = vunpack.c.l.b16 %v1657
        %v1817 = vunpack.c.h.b16 %v1657
        %v1818 = vunpack.c.l.b16 %v1658
        %v1819 = vunpack.c.l.b16 %v1659
        %v1820 = vunpack.c.h.b16 %v1659
        %v1821 = vunpack.c.l.b16 %v1660
        %v1822 = vunpack.c.l.b16 %v1661
        %v1823 = vunpack.c.h.b16 %v1661
        %v1824 = vunpack.c.l.b16 %v1662
        %v1825 = vunpack.c.l.b16 %v1663
        %v1826 = vunpack.c.h.b16 %v1663
        %v1827 = vunpack.c.l.b16 %v1664
        %v1828 = vunpack.c.l.b16 %v1665
        %v1829 = vunpack.c.h.b16 %v1665
        %v1830 = vunpack.c.l.b16 %v1666
        %v1831 = vunpack.c.l.b16 %v1667
        %v1832 = vunpack.c.h.b16 %v1667
        %v1833 = vunpack.c.l.b16 %v1668
        %v1834 = vunpack.c.l.b16 %v1669
        %v1835 = vunpack.c.h.b16 %v1669
        %v1836 = vunpack.c.l.b16 %v1670
        %v1837 = vunpack.c.l.b16 %v1671
        %v1838 = vunpack.c.h.b16 %v1671
        %v1839 = vunpack.c.l.b16 %v1672
        %v1840 = vunpack.c.l.b16 %v1673
        %v1841 = vunpack.c.h.b16 %v1673
        %v1842 = vunpack.c.l.b16 %v1674
        %v1843 = vunpack.c.l.b16 %v1675
        %v1844 = vunpack.c.h.b16 %v1675
        %v1845 = vunpack.c.l.b16 %v1676
        %v1846 = vunpack.c.l.b16 %v1677
        %v1847 = vunpack.c.h.b16 %v1677
        %v1848 = vunpack.c.l.b16 %v1678
        %v1849 = vunpack.c.l.b16 %v1679
        %v1850 = vunpack.c.h.b16 %v1679
        %v1851 = vunpack.c.l.b16 %v1680
        %v1852 = vunpack.c.l.b16 %v1681
        %v1853 = vunpack.c.h.b16 %v1681
        %v1854 = vunpack.c.l.b16 %v1682
        %v1855 = vunpack.c.l.b16 %v1683
        %v1856 = vunpack.c.h.b16 %v1683
        %v1857 = vunpack.c.l.b16 %v1684
        %v1858 = vunpack.c.l.b16 %v1685
        %v1859 = vunpack.c.h.b16 %v1685
        %v1860 = vunpack.c.l.b16 %v1686
        %v1861 = vunpack.c.l.b16 %v1687
        %v1862 = vunpack.c.h.b16 %v1687
        %v1863 = vunpack.c.l.b16 %v1688
        %v1864 = vunpack.c.l.b16 %v1689
        %v1865 = vunpack.c.h.b16 %v1689
        %v1866 = vunpack.c.l.b16 %v1690
        %v1867 = vunpack.c.l.b16 %v1691
        %v1868 = vunpack.c.h.b16 %v1691
        %v1869 = vunpack.c.l.b16 %v1692
        %v1870 = vpack.c.b16 %v1777, %v1774
        %v1871 = vpack.c.b16 %v1778, %v1775
        %v1872 = vpack.c.b16 %v1779, %v1776
        %v1873 = vpack.c.b16 %v1783, %v1780
        %v1874 = vpack.c.b16 %v1784, %v1781
        %v1875 = vpack.c.b16 %v1785, %v1782
        %v1876 = vpack.c.b16 %v1789, %v1786
        %v1877 = vpack.c.b16 %v1790, %v1787
        %v1878 = vpack.c.b16 %v1791, %v1788
        %v1879 = vpack.c.b16 %v1795, %v1792
        %v1880 = vpack.c.b16 %v1796, %v1793
        %v1881 = vpack.c.b16 %v1797, %v1794
        %v1882 = vpack.c.b16 %v1801, %v1798
        %v1883 = vpack.c.b16 %v1802, %v1799
        %v1884 = vpack.c.b16 %v1803, %v1800
        %v1885 = vpack.c.b16 %v1807, %v1804
        %v1886 = vpack.c.b16 %v1808, %v1805
        %v1887 = vpack.c.b16 %v1809, %v1806
        %v1888 = vpack.c.b16 %v1813, %v1810
        %v1889 = vpack.c.b16 %v1814, %v1811
        %v1890 = vpack.c.b16 %v1815, %v1812
        %v1891 = vpack.c.b16 %v1819, %v1816
        %v1892 = vpack.c.b16 %v1820, %v1817
        %v1893 = vpack.c.b16 %v1821, %v1818
        %v1894 = vpack.c.b16 %v1825, %v1822
        %v1895 = vpack.c.b16 %v1826, %v1823
        %v1896 = vpack.c.b16 %v1827, %v1824
        %v1897 = vpack.c.b16 %v1831, %v1828
        %v1898 = vpack.c.b16 %v1832, %v1829
        %v1899 = vpack.c.b16 %v1833, %v1830
        %v1900 = vpack.c.b16 %v1837, %v1834
        %v1901 = vpack.c.b16 %v1838, %v1835
        %v1902 = vpack.c.b16 %v1839, %v1836
        %v1903 = vpack.c.b16 %v1843, %v1840
        %v1904 = vpack.c.b16 %v1844, %v1841
        %v1905 = vpack.c.b16 %v1845, %v1842
        %v1906 = vpack.c.b16 %v1849, %v1846
        %v1907 = vpack.c.b16 %v1850, %v1847
        %v1908 = vpack.c.b16 %v1851, %v1848
        %v1909 = vpack.c.b16 %v1855, %v1852
        %v1910 = vpack.c.b16 %v1856, %v1853
        %v1911 = vpack.c.b16 %v1857, %v1854
        %v1912 = vpack.c.b16 %v1861, %v1858
        %v1913 = vpack.c.b16 %v1862, %v1859
        %v1914 = vpack.c.b16 %v1863, %v1860
        %v1915 = vpack.c.b16 %v1867, %v1864
        %v1916 = vpack.c.b16 %v1868, %v1865
        %v1917 = vpack.c.b16 %v1869, %v1866
        %1966 = vmatprep.subr.bf16.mxu0 %v1892
        %1967 = vmatpush1.bf16.msra.mxu0 %v1891
        %1968 = vmatprep.subr.bf16.mxu0 %v1889
        %1969 = vmatpush1.bf16.msra.mxu0 %v1888
        %1970 = vmatprep.subr.bf16.mxu0 %v1886
        %1971 = vmatpush1.bf16.msra.mxu0 %v1885
        %1972 = vmatprep.subr.bf16.mxu0 %v1883
        %1973 = vmatpush1.bf16.msra.mxu0 %v1882
        %1974 = vmatprep.subr.bf16.mxu0 %v1880
        %1975 = vmatpush1.bf16.msra.mxu0 %v1879
        %1976 = vmatprep.subr.bf16.mxu0 %v1877
        %1977 = vmatpush1.bf16.msra.mxu0 %v1876
        %1978 = vmatprep.subr.bf16.mxu0 %v1874
        %1979 = vmatpush1.bf16.msra.mxu0 %v1873
        %1980 = vmatprep.subr.bf16.mxu0 %v1871
        %1981 = vmatpush1.bf16.msra.mxu0 %v1870
        %1982 = vmatprep.subr.bf16.mxu0 %v1916
        %1983 = vmatpush2.bf16.msra.mxu0 %v1915
        %1984 = vmatprep.subr.bf16.mxu0 %v1913
        %1985 = vmatpush2.bf16.msra.mxu0 %v1912
        %1986 = vmatprep.subr.bf16.mxu0 %v1910
        %1987 = vmatpush2.bf16.msra.mxu0 %v1909
        %1988 = vmatprep.subr.bf16.mxu0 %v1907
        %1989 = vmatpush2.bf16.msra.mxu0 %v1906
        %1990 = vmatprep.subr.bf16.mxu0 %v1904
        %1991 = vmatpush2.bf16.msra.mxu0 %v1903
        %1992 = vmatprep.subr.bf16.mxu0 %v1901
        %1993 = vmatpush2.bf16.msra.mxu0 %v1900
        %1994 = vmatprep.subr.bf16.mxu0 %v1898
        %1995 = vmatpush2.bf16.msra.mxu0 %v1897
        %1996 = vmatprep.subr.bf16.mxu0 %v1895
        %1997 = vmatpush2.bf16.msra.mxu0 %v1894
        %1998 = vmatprep.mubr.bf16.mxu0 %v1628
        %1999 = vmatmul.mubr.bf16.gmra.mxu0 %v1627
        %v2000 = vpop.f32.mrf.mxu0
        %v2001 = vadd.f32 %v1698, %v2000
        %v2002 = vpop.f32.mrf.mxu0
        %v2003 = vadd.f32 %v1702, %v2002
        %v2004 = vpop.f32.mrf.mxu0
        %v2005 = vpop.f32.mrf.mxu0
        %2006 = vdwg.mxu0
        %2007 = vmatprep.subr.bf16.mxu0 0
        %2008 = vmatpush1.bf16.msra.mxu0 %v1893
        %2009 = vmatprep.subr.bf16.mxu0 0
        %2010 = vmatpush1.bf16.msra.mxu0 %v1890
        %2011 = vmatprep.subr.bf16.mxu0 0
        %2012 = vmatpush1.bf16.msra.mxu0 %v1887
        %2013 = vmatprep.subr.bf16.mxu0 0
        %2014 = vmatpush1.bf16.msra.mxu0 %v1884
        %2015 = vmatprep.subr.bf16.mxu0 0
        %2016 = vmatpush1.bf16.msra.mxu0 %v1881
        %2017 = vmatprep.subr.bf16.mxu0 0
        %2018 = vmatpush1.bf16.msra.mxu0 %v1878
        %2019 = vmatprep.subr.bf16.mxu0 0
        %2020 = vmatpush1.bf16.msra.mxu0 %v1875
        %2021 = vmatprep.subr.bf16.mxu0 0
        %2022 = vmatpush1.bf16.msra.mxu0 %v1872
        %2023 = vmatprep.subr.bf16.mxu0 0
        %2024 = vmatpush2.bf16.msra.mxu0 %v1917
        %2025 = vmatprep.subr.bf16.mxu0 0
        %2026 = vmatpush2.bf16.msra.mxu0 %v1914
        %2027 = vmatprep.subr.bf16.mxu0 0
        %2028 = vmatpush2.bf16.msra.mxu0 %v1911
        %2029 = vmatprep.subr.bf16.mxu0 0
        %2030 = vmatpush2.bf16.msra.mxu0 %v1908
        %2031 = vmatprep.subr.bf16.mxu0 0
        %2032 = vmatpush2.bf16.msra.mxu0 %v1905
        %2033 = vmatprep.subr.bf16.mxu0 0
        %2034 = vmatpush2.bf16.msra.mxu0 %v1902
        %2035 = vmatprep.subr.bf16.mxu0 0
        %2036 = vmatpush2.bf16.msra.mxu0 %v1899
        %2037 = vmatprep.subr.bf16.mxu0 0
        %2038 = vmatpush2.bf16.msra.mxu0 %v1896
        %2039 = vmatprep.mubr.bf16.mxu0 %v1628
        %2040 = vmatmul.mubr.bf16.gmra.mxu0 %v1627
        %v2041 = vpop.f32.mrf.mxu0
        %v2042 = vadd.f32 %v1706, %v2041
        %v2043 = vpop.f32.mrf.mxu0
        %v2044 = vpop.f32.mrf.mxu0
        %v2045 = vpop.f32.mrf.mxu0
        %2046 = vdwg.mxu0
        %v2050 = vcombine.low %v2001, %v2003
        %v2052 = vunpack.c.l.s4 1983009808
        %v2053 = vunpack.c.0.s8 %v2052
        %v2054 = vlaneseq
        %v2055 = vshrl.u32 %v2054, 7
        %v2056 = vsub.s32 %v2053, %v2055
        %v2057 = vrot.slane %v2050, %v2056
        %v2059 = vunpack.c.l.s4 1983009808
        %v2060 = vunpack.c.0.s8 %v2059
        %v2061 = vlaneseq
        %v2062 = vshrl.u32 %v2061, 7
        %v2063 = vsub.s32 %v2060, %v2062
        %v2064 = vrot.slane %v2042, %v2063
        %v2065 = vcombine.low %v2057, %v2064
        %2067 = vst [vmem:[%s404] sm:$0x3f] %v2065
        %s2068 = sand.u32 %s216, 1
        %s2069 = scalar_lea.sflag [#allocation4], %s2068
        %s2070 = sand.u32 %s216, 1
        %s2071 = smul.addr %s2070, 6
        %s2072 = scalar_lea.vmem [#allocation13], %s2071
        // Predicated region
        $region73: #{tpu_custom_call.1} parent=47 // pred_check
          %p2073 = pneg %p226
        $region74: #{tpu_custom_call.1} parent=47 // pred_check_branch
          %2075 = sbr.rel (%p2073) target = $region76
        $region75: #{tpu_custom_call.1} parent=47 // pred_region
          %s2076 = smul.u32 3, %s31
          %s2078 = ssub.s32 96, 96
          %2079 = vsyncadd %s2069, %s2078
          %s2080 = smul.addr %s32, 9
          %s2081 = sadd.s32 %s2076, %s2080
          %s2082 = smul.addr %s2081, 32
          %s2083 = scalar_lea.hbm %s7, %s2082
          %s2085 = sshll.u32 %s2072, 4
          %s2086 = int_to_ptr.vmem [resolvable:$true] %s2085
          %2088 = dma.vmem_to_hbm [thread:$0]  %s2086, 96, %s2083, %s2069
        $region76: #{tpu_custom_call.1} parent=47 // pred_fallthru
          _
      $region48: #{tpu_custom_call.1} parent=5 // pred_fallthru
        _
      %p2089 = scmp.le.s32.totalorder 2, %s22
      // Predicated region
      $region77: #{tpu_custom_call.1} parent=5 // pred_check
        %p2090 = pneg %p2089
      $region78: #{tpu_custom_call.1} parent=5 // pred_check_branch
        %2092 = sbr.rel (%p2090) target = $region80
      $region79: #{tpu_custom_call.1} parent=5 // pred_region
        %s2093 = ssub.s32 %s22, 2
        // Predicated region
        $region81: #{tpu_custom_call.1} parent=79 // pred_check
          %p2094 = pneg %p232
        $region82: #{tpu_custom_call.1} parent=79 // pred_check_branch
          %2096 = sbr.rel (%p2094) target = $region84
        $region83: #{tpu_custom_call.1} parent=79 // pred_region
          %s2097 = sand.u32 %s217, 1
          %s2098 = scalar_lea.sflag [#allocation4], %s2097
          %s2099 = sand.u32 %s217, 1
          %s2100 = smul.addr %s2099, 6
          %s2101 = scalar_lea.vmem [#allocation13], %s2100
          %2102 = dma.done %s2098, 96
        $region84: #{tpu_custom_call.1} parent=79 // pred_fallthru
          _
      $region80: #{tpu_custom_call.1} parent=5 // pred_fallthru
        _
    $region6: #{tpu_custom_call.1} parent=1 // loop_footer
      %s26 = sadd.s32 1, %s22
    $region7: #{tpu_custom_call.1} parent=1 // loop_footer_branch
      %21 = sbr.rel target = $region3
    $region8: #{tpu_custom_call.1} parent=1 // loop_exit
      _
    %2103 = vsyncpa [#allocation3], 1
    %s2104 = scalar_lea.sflag [#allocation3], 1
    %2105 = vsyncpa %s2104, 1
    %2106 = vsyncpa [#allocation6], 1
    %2107 = vsyncpa [#allocation9], 1
    %2108 = vsyncpa [#allocation12], 1
    %s2109 = scalar_lea.sflag [#allocation12], 1
    %2110 = vsyncpa %s2109, 1
    %2111 = vsyncpa [#allocation4], 1
    %s2112 = scalar_lea.sflag [#allocation4], 1
    %2113 = vsyncpa %s2112, 1

</llo_original>
